<compile_context>
chip_gen: v6e
topology: v6e:2x2x1
jax: 0.10.0
libtpu: 0.0.40
codegen_flags: <defaults>
</compile_context>

<pallas_src>
import jax
import jax.numpy as jnp
from jax.experimental import pallas as pl
from jax.experimental.pallas import tpu as pltpu

# Matmul operand dtype.  float32 matches PyTorch numerics exactly; on v6e/v7x
# set to jnp.bfloat16 to halve DMA bytes and ~2x MXU throughput (accumulation
# stays fp32 via preferred_element_type, bias/ReLU/outputs stay fp32).
COMPUTE_DTYPE = jnp.float32

_VMEM_LIMIT_BYTES = 64 * 1024 * 1024


def _round_up(x, m):
    return ((x + m - 1) // m) * m


def _pad_to(a, shape):
    return jnp.pad(a, [(0, s - d) for d, s in zip(a.shape, shape)])


# ----------------------------------------------------------------------------
# Pallas kernels
# ----------------------------------------------------------------------------
def _conv_bias_relu_pool_kernel(w_ref, b_ref, cols_ref, o_ref):
    # w: (O_pad, K_pad), b: (O_pad, 1), cols: (K_pad, TM), o: (O_pad, TM)
    # Grid axis 1 is the 2x2 pool-quadrant reduction axis; the output block is
    # resident across it and used as the max accumulator (P3 pattern).
    q = pl.program_id(1)
    y = jnp.dot(w_ref[...], cols_ref[...],
                preferred_element_type=jnp.float32) + b_ref[...]

    @pl.when(q == 0)
    def _():
        o_ref[...] = y

    @pl.when(q > 0)
    def _():
        o_ref[...] = jnp.maximum(o_ref[...], y)

    @pl.when(q == pl.num_programs(1) - 1)
    def _():
        o_ref[...] = jnp.maximum(o_ref[...], 0.0)   # ReLU(maxpool(conv+bias))


def _fc3_kernel(x_ref, w1_ref, b1_ref, w2_ref, b2_ref, w3_ref, b3_ref, o_ref):
    # x: (D_in, TN) transposed activations; all weights resident in VMEM.
    h = jnp.dot(w1_ref[...], x_ref[...], preferred_element_type=jnp.float32)
    h = jnp.maximum(h + b1_ref[...], 0.0)
    h = jnp.dot(w2_ref[...], h.astype(w2_ref.dtype),
                preferred_element_type=jnp.float32)
    h = jnp.maximum(h + b2_ref[...], 0.0)
    h = jnp.dot(w3_ref[...], h.astype(w3_ref.dtype),
                preferred_element_type=jnp.float32)
    o_ref[...] = (h + b3_ref[...]).astype(o_ref.dtype)


# ----------------------------------------------------------------------------
# Conv + ReLU + MaxPool(2,2) block
# ----------------------------------------------------------------------------
def _im2col_pooled(x_nchw, k):
    """Conv patches grouped by 2x2 pool quadrant.

    Returns cols of shape (4, C*k*k, N*PH*PW):
      cols[2*dy + dx, c*k*k + kh*k + kw, (n*PH + ph)*PW + pw]
        = x[n, c, 2*ph + dy + kh, 2*pw + dx + kw]
    i.e. the input pixel feeding conv-output position (2*ph+dy, 2*pw+dx) for
    kernel tap (c, kh, kw).  Patch flattening (c, kh, kw) matches PyTorch's
    Conv2d weight layout (O, C, kh, kw) -> (O, C*k*k).
    """
    N, C, H, W = x_nchw.shape
    OH, OW = H - k + 1, W - k + 1
    PH, PW = OH // 2, OW // 2
    quads = []
    for dy in range(2):
        for dx in range(2):
            taps = []
            for kh in range(k):
                for kw in range(k):
                    taps.append(
                        x_nchw[:, :,
                               dy + kh: dy + kh + 2 * PH: 2,
                               dx + kw: dx + kw + 2 * PW: 2])   # (N,C,PH,PW)
            p = jnp.stack(taps, axis=0)            # (k*k, N, C, PH, PW)
            p = p.transpose(2, 0, 1, 3, 4)         # (C, k*k, N, PH, PW)
            quads.append(p.reshape(C * k * k, N * PH * PW))
    return jnp.stack(quads, axis=0), PH, PW


def conv_relu_pool(x_nchw, w_oihw, b_o, *, max_tm=2048):
    """Conv2d(k, stride 1, valid) + bias + ReLU + MaxPool2d(2, 2), fused."""
    N, C, H, W = x_nchw.shape
    O, _, k, _ = w_oihw.shape
    cols, PH, PW = _im2col_pooled(x_nchw, k)       # (4, K, M)
    K, M = C * k * k, N * PH * PW

    K_pad = _round_up(K, 8)                        # sublane-friendly
    O_pad = _round_up(O, 8)
    TM = min(max_tm, _round_up(M, 128))            # lane-dense M tile
    M_pad = _round_up(M, TM)

    cols_p = _pad_to(cols.astype(COMPUTE_DTYPE), (4, K_pad, M_pad))
    w_p = _pad_to(w_oihw.reshape(O, K).astype(COMPUTE_DTYPE), (O_pad, K_pad))
    b_p = _pad_to(b_o.reshape(O, 1).astype(jnp.float32), (O_pad, 1))

    itemsize = jnp.dtype(COMPUTE_DTYPE).itemsize
    cost = pl.CostEstimate(
        flops=2 * 4 * O_pad * K_pad * M_pad,
        transcendentals=0,
        bytes_accessed=(4 * K_pad * M_pad + O_pad * K_pad) * itemsize
        + O_pad * M_pad * 4,
    )

    out = pl.pallas_call(
        _conv_bias_relu_pool_kernel,
        out_shape=jax.ShapeDtypeStruct((O_pad, M_pad), jnp.float32),
        grid=(M_pad // TM, 4),
        in_specs=[
            pl.BlockSpec((O_pad, K_pad), lambda i, q: (0, 0)),      # weights (resident)
            pl.BlockSpec((O_pad, 1), lambda i, q: (0, 0)),          # bias (resident)
            pl.BlockSpec((None, K_pad, TM), lambda i, q: (q, 0, i)),  # patch tile
        ],
        out_specs=pl.BlockSpec((O_pad, TM), lambda i, q: (0, i)),
        compiler_params=pltpu.CompilerParams(
            dimension_semantics=("parallel", "arbitrary"),
            vmem_limit_bytes=_VMEM_LIMIT_BYTES,
        ),
        cost_estimate=cost,
    )(w_p, b_p, cols_p)

    out = out[:O, :M]                                       # (O, N*PH*PW)
    return out.reshape(O, N, PH, PW).transpose(1, 0, 2, 3)  # back to NCHW


# ----------------------------------------------------------------------------
# Fused fc1 -> relu -> fc2 -> relu -> fc3 block
# ----------------------------------------------------------------------------
def fc_stack(x_flat, w1, b1, w2, b2, w3, b3, *, tn=128):
    N, D_in = x_flat.shape
    D1, D2, D3 = w1.shape[0], w2.shape[0], w3.shape[0]      # 120, 84, 10
    D_in_p = _round_up(D_in, 8)
    D1_p, D2_p, D3_p = _round_up(D1, 8), _round_up(D2, 8), _round_up(D3, 8)
    N_pad = _round_up(N, tn)

    xT = _pad_to(x_flat.T.astype(COMPUTE_DTYPE), (D_in_p, N_pad))
    w1_p = _pad_to(w1.astype(COMPUTE_DTYPE), (D1_p, D_in_p))
    w2_p = _pad_to(w2.astype(COMPUTE_DTYPE), (D2_p, D1_p))
    w3_p = _pad_to(w3.astype(COMPUTE_DTYPE), (D3_p, D2_p))
    b1_p = _pad_to(b1.reshape(-1, 1).astype(jnp.float32), (D1_p, 1))
    b2_p = _pad_to(b2.reshape(-1, 1).astype(jnp.float32), (D2_p, 1))
    b3_p = _pad_to(b3.reshape(-1, 1).astype(jnp.float32), (D3_p, 1))

    itemsize = jnp.dtype(COMPUTE_DTYPE).itemsize
    cost = pl.CostEstimate(
        flops=2 * N_pad * (D1_p * D_in_p + D2_p * D1_p + D3_p * D2_p),
        transcendentals=0,
        bytes_accessed=(D_in_p * N_pad + D1_p * D_in_p + D2_p * D1_p
                        + D3_p * D2_p) * itemsize + D3_p * N_pad * 4,
    )

    out = pl.pallas_call(
        _fc3_kernel,
        out_shape=jax.ShapeDtypeStruct((D3_p, N_pad), jnp.float32),
        grid=(N_pad // tn,),
        in_specs=[
            pl.BlockSpec((D_in_p, tn), lambda i: (0, i)),
            pl.BlockSpec((D1_p, D_in_p), lambda i: (0, 0)),
            pl.BlockSpec((D1_p, 1), lambda i: (0, 0)),
            pl.BlockSpec((D2_p, D1_p), lambda i: (0, 0)),
            pl.BlockSpec((D2_p, 1), lambda i: (0, 0)),
            pl.BlockSpec((D3_p, D2_p), lambda i: (0, 0)),
            pl.BlockSpec((D3_p, 1), lambda i: (0, 0)),
        ],
        out_specs=pl.BlockSpec((D3_p, tn), lambda i: (0, i)),
        compiler_params=pltpu.CompilerParams(
            dimension_semantics=("parallel",),
            vmem_limit_bytes=_VMEM_LIMIT_BYTES,
        ),
        cost_estimate=cost,
    )(xT, w1_p, b1_p, w2_p, b2_p, w3_p, b3_p)

    return out[:D3, :N].T                                   # (N, 10)


# ----------------------------------------------------------------------------
# Full forward
# ----------------------------------------------------------------------------
def lenet5_forward(x, params):
    # x: (N, 3, 32, 32) float32, NCHW (matches PyTorch)
    x = conv_relu_pool(x, params["conv1_w"], params["conv1_b"])   # (N, 6, 14, 14)
    x = conv_relu_pool(x, params["conv2_w"], params["conv2_b"])   # (N, 16, 5, 5)
    N = x.shape[0]
    x = x.reshape(N, 16 * 5 * 5)                                  # == x.view(-1, 400)
    return fc_stack(x, params["fc1_w"], params["fc1_b"],
                    params["fc2_w"], params["fc2_b"],
                    params["fc3_w"], params["fc3_b"])             # (N, 10)


# ----------------------------------------------------------------------------
# Deterministic parameter init (shapes match nn.Conv2d / nn.Linear of LeNet5)
# ----------------------------------------------------------------------------
def init_params(key):
    def uniform(key, shape, fan_in):
        bound = 1.0 / jnp.sqrt(jnp.float32(fan_in))
        return jax.random.uniform(key, shape, jnp.float32, -bound, bound)

    keys = jax.random.split(key, 10)
    return {
        "conv1_w": uniform(keys[0], (6, 3, 5, 5), 3 * 5 * 5),
        "conv1_b": uniform(keys[1], (6,), 3 * 5 * 5),
        "conv2_w": uniform(keys[2], (16, 6, 5, 5), 6 * 5 * 5),
        "conv2_b": uniform(keys[3], (16,), 6 * 5 * 5),
        "fc1_w": uniform(keys[4], (120, 400), 400),
        "fc1_b": uniform(keys[5], (120,), 400),
        "fc2_w": uniform(keys[6], (84, 120), 120),
        "fc2_b": uniform(keys[7], (84,), 120),
        "fc3_w": uniform(keys[8], (10, 84), 84),
        "fc3_b": uniform(keys[9], (10,), 84),
    }


# Pure-JAX reference (high precision) for a numerical sanity check.
def _reference_forward(x, p):
    hi = jax.lax.Precision.HIGHEST
    y = jax.lax.conv_general_dilated(
        x, p["conv1_w"], (1, 1), "VALID",
        dimension_numbers=("NCHW", "OIHW", "NCHW"), precision=hi)
    y = jax.nn.relu(y + p["conv1_b"].reshape(1, -1, 1, 1))
    y = jax.lax.reduce_window(y, -jnp.inf, jax.lax.max,
                              (1, 1, 2, 2), (1, 1, 2, 2), "VALID")
    y = jax.lax.conv_general_dilated(
        y, p["conv2_w"], (1, 1), "VALID",
        dimension_numbers=("NCHW", "OIHW", "NCHW"), precision=hi)
    y = jax.nn.relu(y + p["conv2_b"].reshape(1, -1, 1, 1))
    y = jax.lax.reduce_window(y, -jnp.inf, jax.lax.max,
                              (1, 1, 2, 2), (1, 1, 2, 2), "VALID")
    y = y.reshape(y.shape[0], -1)
    y = jax.nn.relu(jnp.dot(y, p["fc1_w"].T, precision=hi) + p["fc1_b"])
    y = jax.nn.relu(jnp.dot(y, p["fc2_w"].T, precision=hi) + p["fc2_b"])
    return jnp.dot(y, p["fc3_w"].T, precision=hi) + p["fc3_b"]


if __name__ == "__main__":
    key = jax.random.PRNGKey(0)
    pkey, xkey = jax.random.split(key)
    params = init_params(pkey)

    # LeNet-5 requires 32x32 spatial input so the flatten is 16*5*5 = 400.
    x = jax.random.normal(xkey, (2, 3, 32, 32), dtype=jnp.float32)

    out = jax.jit(lenet5_forward)(x, params)
    out = jax.block_until_ready(out)
    assert out.shape == (2, 10) and out.dtype == jnp.float32

    ref = jax.block_until_ready(_reference_forward(x, params))
    assert jnp.max(jnp.abs(out - ref)) < 1e-2, "mismatch vs pure-JAX reference"

    print("KERNEL_OK")
</pallas_src>

<mosaic_0001>
module attributes {stable_mosaic.version = 11 : i64} {
  func.func @_conv_bias_relu_pool_kernel(%arg0: i32, %arg1: i32, %arg2: memref<8x80xf32, #tpu.memory_space<vmem>>, %arg3: memref<8x1xf32, #tpu.memory_space<vmem>>, %arg4: memref<1x80x512xf32, #tpu.memory_space<vmem>>, %arg5: memref<8x512xf32, #tpu.memory_space<vmem>>) attributes {dimension_semantics = [#tpu.dimension_semantics<parallel>, #tpu.dimension_semantics<arbitrary>], iteration_bounds = array<i64: 1, 4>, scalar_prefetch = 0 : i64, scratch_operands = 0 : i64, tpu.core_type = #tpu.core_type<tc>, window_params = [{pipeline_mode = #tpu.pipeline_mode<synchronous>, transform_indices = @transform_0, window_bounds = array<i64: 8, 80>}, {pipeline_mode = #tpu.pipeline_mode<synchronous>, transform_indices = @transform_1, window_bounds = array<i64: 8, 1>}, {transform_indices = @transform_2, window_bounds = array<i64: 1, 80, 512>}, {transform_indices = @transform_3, window_bounds = array<i64: 8, 512>}]} {
    %c0 = arith.constant 0 : index
    %c0_0 = arith.constant 0 : index
    %0 = vector.load %arg2[%c0, %c0_0] : memref<8x80xf32, #tpu.memory_space<vmem>>, vector<8x80xf32>
    %c0_1 = arith.constant 0 : index
    %c0_2 = arith.constant 0 : index
    %c0_3 = arith.constant 0 : index
    %1 = vector.load %arg4[%c0_1, %c0_2, %c0_3] : memref<1x80x512xf32, #tpu.memory_space<vmem>>, vector<1x80x512xf32>
    %2 = vector.shape_cast %1 : vector<1x80x512xf32> to vector<80x512xf32>
    %cst = arith.constant dense<0.000000e+00> : vector<8x512xf32>
    %3 = tpu.matmul %0, %2, %cst {dimension_numbers = #tpu.dot_dimension_numbers<[1], [0], [0], [1], [0, 0, 1, 1], [], []>} : vector<8x80xf32>, vector<80x512xf32>, vector<8x512xf32> -> vector<8x512xf32>
    %c0_4 = arith.constant 0 : index
    %c0_5 = arith.constant 0 : index
    %4 = vector.load %arg3[%c0_4, %c0_5] : memref<8x1xf32, #tpu.memory_space<vmem>>, vector<8x1xf32>
    %5 = vector.broadcast %4 : vector<8x1xf32> to vector<8x512xf32>
    %6 = arith.addf %3, %5 : vector<8x512xf32>
    %c0_i32 = arith.constant 0 : i32
    %7 = arith.cmpi eq, %arg1, %c0_i32 : i32
    %8 = arith.extui %7 : i1 to i32
    %c0_i32_6 = arith.constant 0 : i32
    %9 = arith.cmpi ne, %8, %c0_i32_6 : i32
    scf.if %9 {
      %c0_10 = arith.constant 0 : index
      %c0_11 = arith.constant 0 : index
      %16 = vector.load %arg5[%c0_10, %c0_11] : memref<8x512xf32, #tpu.memory_space<vmem>>, vector<8x512xf32>
      tpu.vector_store %arg5[%c0_10, %c0_11], %6 {strides = array<i32>} : memref<8x512xf32, #tpu.memory_space<vmem>>, vector<8x512xf32>,
    } else {
    }
    %c0_i32_7 = arith.constant 0 : i32
    %10 = arith.cmpi sgt, %arg1, %c0_i32_7 : i32
    %11 = arith.extui %10 : i1 to i32
    %c0_i32_8 = arith.constant 0 : i32
    %12 = arith.cmpi ne, %11, %c0_i32_8 : i32
    scf.if %12 {
      %c0_10 = arith.constant 0 : index
      %c0_11 = arith.constant 0 : index
      %16 = vector.load %arg5[%c0_10, %c0_11] : memref<8x512xf32, #tpu.memory_space<vmem>>, vector<8x512xf32>
      %17 = arith.maximumf %16, %6 : vector<8x512xf32>
      %c0_12 = arith.constant 0 : index
      %c0_13 = arith.constant 0 : index
      %18 = vector.load %arg5[%c0_12, %c0_13] : memref<8x512xf32, #tpu.memory_space<vmem>>, vector<8x512xf32>
      tpu.vector_store %arg5[%c0_12, %c0_13], %17 {strides = array<i32>} : memref<8x512xf32, #tpu.memory_space<vmem>>, vector<8x512xf32>,
    } else {
    }
    %c3_i32 = arith.constant 3 : i32
    %13 = arith.cmpi eq, %arg1, %c3_i32 : i32
    %14 = arith.extui %13 : i1 to i32
    %c0_i32_9 = arith.constant 0 : i32
    %15 = arith.cmpi ne, %14, %c0_i32_9 : i32
    scf.if %15 {
      %c0_10 = arith.constant 0 : index
      %c0_11 = arith.constant 0 : index
      %16 = vector.load %arg5[%c0_10, %c0_11] : memref<8x512xf32, #tpu.memory_space<vmem>>, vector<8x512xf32>
      %cst_12 = arith.constant 0.000000e+00 : f32
      %17 = vector.broadcast %cst_12 : f32 to vector<8x512xf32>
      %18 = arith.maximumf %16, %17 : vector<8x512xf32>
      %c0_13 = arith.constant 0 : index
      %c0_14 = arith.constant 0 : index
      %19 = vector.load %arg5[%c0_13, %c0_14] : memref<8x512xf32, #tpu.memory_space<vmem>>, vector<8x512xf32>
      tpu.vector_store %arg5[%c0_13, %c0_14], %18 {strides = array<i32>} : memref<8x512xf32, #tpu.memory_space<vmem>>, vector<8x512xf32>,
    } else {
    }
    return
  }
  func.func @transform_0(%arg0: i32, %arg1: i32) -> (i32, i32) {
    %c0_i32 = arith.constant 0 : i32
    %c0_i32_0 = arith.constant 0 : i32
    %c0_i32_1 = arith.constant 0 : i32
    return %c0_i32, %c0_i32_0 : i32, i32
  }
  func.func @transform_1(%arg0: i32, %arg1: i32) -> (i32, i32) {
    %c0_i32 = arith.constant 0 : i32
    %c0_i32_0 = arith.constant 0 : i32
    %c0_i32_1 = arith.constant 0 : i32
    return %c0_i32, %c0_i32_0 : i32, i32
  }
  func.func @transform_2(%arg0: i32, %arg1: i32) -> (i32, i32, i32) {
    %c0_i32 = arith.constant 0 : i32
    %c0_i32_0 = arith.constant 0 : i32
    return %arg1, %c0_i32, %arg0 : i32, i32, i32
  }
  func.func @transform_3(%arg0: i32, %arg1: i32) -> (i32, i32) {
    %c0_i32 = arith.constant 0 : i32
    %c0_i32_0 = arith.constant 0 : i32
    return %c0_i32, %arg0 : i32, i32
  }
}

module attributes {stable_mosaic.version = 11 : i64} {
  func.func @_conv_bias_relu_pool_kernel(%arg0: i32, %arg1: i32, %arg2: memref<16x152xf32, #tpu.memory_space<vmem>>, %arg3: memref<16x1xf32, #tpu.memory_space<vmem>>, %arg4: memref<1x152x128xf32, #tpu.memory_space<vmem>>, %arg5: memref<16x128xf32, #tpu.memory_space<vmem>>) attributes {dimension_semantics = [#tpu.dimension_semantics<parallel>, #tpu.dimension_semantics<arbitrary>], iteration_bounds = array<i64: 1, 4>, scalar_prefetch = 0 : i64, scratch_operands = 0 : i64, tpu.core_type = #tpu.core_type<tc>, window_params = [{pipeline_mode = #tpu.pipeline_mode<synchronous>, transform_indices = @transform_0, window_bounds = array<i64: 16, 152>}, {pipeline_mode = #tpu.pipeline_mode<synchronous>, transform_indices = @transform_1, window_bounds = array<i64: 16, 1>}, {transform_indices = @transform_2, window_bounds = array<i64: 1, 152, 128>}, {transform_indices = @transform_3, window_bounds = array<i64: 16, 128>}]} {
    %c0 = arith.constant 0 : index
    %c0_0 = arith.constant 0 : index
    %0 = vector.load %arg2[%c0, %c0_0] : memref<16x152xf32, #tpu.memory_space<vmem>>, vector<16x152xf32>
    %c0_1 = arith.constant 0 : index
    %c0_2 = arith.constant 0 : index
    %c0_3 = arith.constant 0 : index
    %1 = vector.load %arg4[%c0_1, %c0_2, %c0_3] : memref<1x152x128xf32, #tpu.memory_space<vmem>>, vector<1x152x128xf32>
    %2 = vector.shape_cast %1 : vector<1x152x128xf32> to vector<152x128xf32>
    %cst = arith.constant dense<0.000000e+00> : vector<16x128xf32>
    %3 = tpu.matmul %0, %2, %cst {dimension_numbers = #tpu.dot_dimension_numbers<[1], [0], [0], [1], [0, 0, 1, 1], [], []>} : vector<16x152xf32>, vector<152x128xf32>, vector<16x128xf32> -> vector<16x128xf32>
    %c0_4 = arith.constant 0 : index
    %c0_5 = arith.constant 0 : index
    %4 = vector.load %arg3[%c0_4, %c0_5] : memref<16x1xf32, #tpu.memory_space<vmem>>, vector<16x1xf32>
    %5 = vector.broadcast %4 : vector<16x1xf32> to vector<16x128xf32>
    %6 = arith.addf %3, %5 : vector<16x128xf32>
    %c0_i32 = arith.constant 0 : i32
    %7 = arith.cmpi eq, %arg1, %c0_i32 : i32
    %8 = arith.extui %7 : i1 to i32
    %c0_i32_6 = arith.constant 0 : i32
    %9 = arith.cmpi ne, %8, %c0_i32_6 : i32
    scf.if %9 {
      %c0_10 = arith.constant 0 : index
      %c0_11 = arith.constant 0 : index
      %16 = vector.load %arg5[%c0_10, %c0_11] : memref<16x128xf32, #tpu.memory_space<vmem>>, vector<16x128xf32>
      tpu.vector_store %arg5[%c0_10, %c0_11], %6 {strides = array<i32>} : memref<16x128xf32, #tpu.memory_space<vmem>>, vector<16x128xf32>,
    } else {
    }
    %c0_i32_7 = arith.constant 0 : i32
    %10 = arith.cmpi sgt, %arg1, %c0_i32_7 : i32
    %11 = arith.extui %10 : i1 to i32
    %c0_i32_8 = arith.constant 0 : i32
    %12 = arith.cmpi ne, %11, %c0_i32_8 : i32
    scf.if %12 {
      %c0_10 = arith.constant 0 : index
      %c0_11 = arith.constant 0 : index
      %16 = vector.load %arg5[%c0_10, %c0_11] : memref<16x128xf32, #tpu.memory_space<vmem>>, vector<16x128xf32>
      %17 = arith.maximumf %16, %6 : vector<16x128xf32>
      %c0_12 = arith.constant 0 : index
      %c0_13 = arith.constant 0 : index
      %18 = vector.load %arg5[%c0_12, %c0_13] : memref<16x128xf32, #tpu.memory_space<vmem>>, vector<16x128xf32>
      tpu.vector_store %arg5[%c0_12, %c0_13], %17 {strides = array<i32>} : memref<16x128xf32, #tpu.memory_space<vmem>>, vector<16x128xf32>,
    } else {
    }
    %c3_i32 = arith.constant 3 : i32
    %13 = arith.cmpi eq, %arg1, %c3_i32 : i32
    %14 = arith.extui %13 : i1 to i32
    %c0_i32_9 = arith.constant 0 : i32
    %15 = arith.cmpi ne, %14, %c0_i32_9 : i32
    scf.if %15 {
      %c0_10 = arith.constant 0 : index
      %c0_11 = arith.constant 0 : index
      %16 = vector.load %arg5[%c0_10, %c0_11] : memref<16x128xf32, #tpu.memory_space<vmem>>, vector<16x128xf32>
      %cst_12 = arith.constant 0.000000e+00 : f32
      %17 = vector.broadcast %cst_12 : f32 to vector<16x128xf32>
      %18 = arith.maximumf %16, %17 : vector<16x128xf32>
      %c0_13 = arith.constant 0 : index
      %c0_14 = arith.constant 0 : index
      %19 = vector.load %arg5[%c0_13, %c0_14] : memref<16x128xf32, #tpu.memory_space<vmem>>, vector<16x128xf32>
      tpu.vector_store %arg5[%c0_13, %c0_14], %18 {strides = array<i32>} : memref<16x128xf32, #tpu.memory_space<vmem>>, vector<16x128xf32>,
    } else {
    }
    return
  }
  func.func @transform_0(%arg0: i32, %arg1: i32) -> (i32, i32) {
    %c0_i32 = arith.constant 0 : i32
    %c0_i32_0 = arith.constant 0 : i32
    %c0_i32_1 = arith.constant 0 : i32
    return %c0_i32, %c0_i32_0 : i32, i32
  }
  func.func @transform_1(%arg0: i32, %arg1: i32) -> (i32, i32) {
    %c0_i32 = arith.constant 0 : i32
    %c0_i32_0 = arith.constant 0 : i32
    %c0_i32_1 = arith.constant 0 : i32
    return %c0_i32, %c0_i32_0 : i32, i32
  }
  func.func @transform_2(%arg0: i32, %arg1: i32) -> (i32, i32, i32) {
    %c0_i32 = arith.constant 0 : i32
    %c0_i32_0 = arith.constant 0 : i32
    return %arg1, %c0_i32, %arg0 : i32, i32, i32
  }
  func.func @transform_3(%arg0: i32, %arg1: i32) -> (i32, i32) {
    %c0_i32 = arith.constant 0 : i32
    %c0_i32_0 = arith.constant 0 : i32
    return %c0_i32, %arg0 : i32, i32
  }
}

module attributes {stable_mosaic.version = 11 : i64} {
  func.func @_fc3_kernel(%arg0: i32, %arg1: memref<400x128xf32, #tpu.memory_space<vmem>>, %arg2: memref<120x400xf32, #tpu.memory_space<vmem>>, %arg3: memref<120x1xf32, #tpu.memory_space<vmem>>, %arg4: memref<88x120xf32, #tpu.memory_space<vmem>>, %arg5: memref<88x1xf32, #tpu.memory_space<vmem>>, %arg6: memref<16x88xf32, #tpu.memory_space<vmem>>, %arg7: memref<16x1xf32, #tpu.memory_space<vmem>>, %arg8: memref<16x128xf32, #tpu.memory_space<vmem>>) attributes {dimension_semantics = [#tpu.dimension_semantics<parallel>], iteration_bounds = array<i64: 1>, scalar_prefetch = 0 : i64, scratch_operands = 0 : i64, tpu.core_type = #tpu.core_type<tc>, window_params = [{transform_indices = @transform_0, window_bounds = array<i64: 400, 128>}, {pipeline_mode = #tpu.pipeline_mode<synchronous>, transform_indices = @transform_1, window_bounds = array<i64: 120, 400>}, {pipeline_mode = #tpu.pipeline_mode<synchronous>, transform_indices = @transform_2, window_bounds = array<i64: 120, 1>}, {pipeline_mode = #tpu.pipeline_mode<synchronous>, transform_indices = @transform_3, window_bounds = array<i64: 88, 120>}, {pipeline_mode = #tpu.pipeline_mode<synchronous>, transform_indices = @transform_4, window_bounds = array<i64: 88, 1>}, {pipeline_mode = #tpu.pipeline_mode<synchronous>, transform_indices = @transform_5, window_bounds = array<i64: 16, 88>}, {pipeline_mode = #tpu.pipeline_mode<synchronous>, transform_indices = @transform_6, window_bounds = array<i64: 16, 1>}, {transform_indices = @transform_7, window_bounds = array<i64: 16, 128>}]} {
    %c0 = arith.constant 0 : index
    %c0_0 = arith.constant 0 : index
    %0 = vector.load %arg2[%c0, %c0_0] : memref<120x400xf32, #tpu.memory_space<vmem>>, vector<120x400xf32>
    %c0_1 = arith.constant 0 : index
    %c0_2 = arith.constant 0 : index
    %1 = vector.load %arg1[%c0_1, %c0_2] : memref<400x128xf32, #tpu.memory_space<vmem>>, vector<400x128xf32>
    %cst = arith.constant dense<0.000000e+00> : vector<120x128xf32>
    %2 = tpu.matmul %0, %1, %cst {dimension_numbers = #tpu.dot_dimension_numbers<[1], [0], [0], [1], [0, 0, 1, 1], [], []>} : vector<120x400xf32>, vector<400x128xf32>, vector<120x128xf32> -> vector<120x128xf32>
    %c0_3 = arith.constant 0 : index
    %c0_4 = arith.constant 0 : index
    %3 = vector.load %arg3[%c0_3, %c0_4] : memref<120x1xf32, #tpu.memory_space<vmem>>, vector<120x1xf32>
    %4 = vector.broadcast %3 : vector<120x1xf32> to vector<120x128xf32>
    %5 = arith.addf %2, %4 : vector<120x128xf32>
    %cst_5 = arith.constant 0.000000e+00 : f32
    %6 = vector.broadcast %cst_5 : f32 to vector<120x128xf32>
    %7 = arith.maximumf %5, %6 : vector<120x128xf32>
    %c0_6 = arith.constant 0 : index
    %c0_7 = arith.constant 0 : index
    %8 = vector.load %arg4[%c0_6, %c0_7] : memref<88x120xf32, #tpu.memory_space<vmem>>, vector<88x120xf32>
    %cst_8 = arith.constant dense<0.000000e+00> : vector<88x128xf32>
    %9 = tpu.matmul %8, %7, %cst_8 {dimension_numbers = #tpu.dot_dimension_numbers<[1], [0], [0], [1], [0, 0, 1, 1], [], []>} : vector<88x120xf32>, vector<120x128xf32>, vector<88x128xf32> -> vector<88x128xf32>
    %c0_9 = arith.constant 0 : index
    %c0_10 = arith.constant 0 : index
    %10 = vector.load %arg5[%c0_9, %c0_10] : memref<88x1xf32, #tpu.memory_space<vmem>>, vector<88x1xf32>
    %11 = vector.broadcast %10 : vector<88x1xf32> to vector<88x128xf32>
    %12 = arith.addf %9, %11 : vector<88x128xf32>
    %cst_11 = arith.constant 0.000000e+00 : f32
    %13 = vector.broadcast %cst_11 : f32 to vector<88x128xf32>
    %14 = arith.maximumf %12, %13 : vector<88x128xf32>
    %c0_12 = arith.constant 0 : index
    %c0_13 = arith.constant 0 : index
    %15 = vector.load %arg6[%c0_12, %c0_13] : memref<16x88xf32, #tpu.memory_space<vmem>>, vector<16x88xf32>
    %cst_14 = arith.constant dense<0.000000e+00> : vector<16x128xf32>
    %16 = tpu.matmul %15, %14, %cst_14 {dimension_numbers = #tpu.dot_dimension_numbers<[1], [0], [0], [1], [0, 0, 1, 1], [], []>} : vector<16x88xf32>, vector<88x128xf32>, vector<16x128xf32> -> vector<16x128xf32>
    %c0_15 = arith.constant 0 : index
    %c0_16 = arith.constant 0 : index
    %17 = vector.load %arg7[%c0_15, %c0_16] : memref<16x1xf32, #tpu.memory_space<vmem>>, vector<16x1xf32>
    %18 = vector.broadcast %17 : vector<16x1xf32> to vector<16x128xf32>
    %19 = arith.addf %16, %18 : vector<16x128xf32>
    %c0_17 = arith.constant 0 : index
    %c0_18 = arith.constant 0 : index
    %20 = vector.load %arg8[%c0_17, %c0_18] : memref<16x128xf32, #tpu.memory_space<vmem>>, vector<16x128xf32>
    tpu.vector_store %arg8[%c0_17, %c0_18], %19 {strides = array<i32>} : memref<16x128xf32, #tpu.memory_space<vmem>>, vector<16x128xf32>,
    return
  }
  func.func @transform_0(%arg0: i32) -> (i32, i32) {
    %c0_i32 = arith.constant 0 : i32
    %c0_i32_0 = arith.constant 0 : i32
    return %c0_i32, %arg0 : i32, i32
  }
  func.func @transform_1(%arg0: i32) -> (i32, i32) {
    %c0_i32 = arith.constant 0 : i32
    %c0_i32_0 = arith.constant 0 : i32
    %c0_i32_1 = arith.constant 0 : i32
    return %c0_i32, %c0_i32_0 : i32, i32
  }
  func.func @transform_2(%arg0: i32) -> (i32, i32) {
    %c0_i32 = arith.constant 0 : i32
    %c0_i32_0 = arith.constant 0 : i32
    %c0_i32_1 = arith.constant 0 : i32
    return %c0_i32, %c0_i32_0 : i32, i32
  }
  func.func @transform_3(%arg0: i32) -> (i32, i32) {
    %c0_i32 = arith.constant 0 : i32
    %c0_i32_0 = arith.constant 0 : i32
    %c0_i32_1 = arith.constant 0 : i32
    return %c0_i32, %c0_i32_0 : i32, i32
  }
  func.func @transform_4(%arg0: i32) -> (i32, i32) {
    %c0_i32 = arith.constant 0 : i32
    %c0_i32_0 = arith.constant 0 : i32
    %c0_i32_1 = arith.constant 0 : i32
    return %c0_i32, %c0_i32_0 : i32, i32
  }
  func.func @transform_5(%arg0: i32) -> (i32, i32) {
    %c0_i32 = arith.constant 0 : i32
    %c0_i32_0 = arith.constant 0 : i32
    %c0_i32_1 = arith.constant 0 : i32
    return %c0_i32, %c0_i32_0 : i32, i32
  }
  func.func @transform_6(%arg0: i32) -> (i32, i32) {
    %c0_i32 = arith.constant 0 : i32
    %c0_i32_0 = arith.constant 0 : i32
    %c0_i32_1 = arith.constant 0 : i32
    return %c0_i32, %c0_i32_0 : i32, i32
  }
  func.func @transform_7(%arg0: i32) -> (i32, i32) {
    %c0_i32 = arith.constant 0 : i32
    %c0_i32_0 = arith.constant 0 : i32
    return %c0_i32, %arg0 : i32, i32
  }
}

</mosaic_0001>

<llo_original>
// kernel: lenet5_forward.3
$region0: #{lenet5_forward.3}
  #allocation0 [shape = 'u32[]', space=smem, size = 0x4, offset = 0x4, fixed_abs, tag = 'smem constant byte address 0x4 - core index']
  #allocation1 [shape = 'u32[144,128]{1,0:T(1,128)}', space=vmem, size = 0x12000, scoped, tag = 'internal scratch']
  %s0 = inlined_call_operand.vmem [shape: f32[8,80], index: 0, kind: input, shape index: {}]
  %s1 = inlined_call_operand.vmem [shape: f32[8,1], index: 1, kind: input, shape index: {}]
  %s2 = inlined_call_operand.vmem [shape: f32[4,80,512], index: 2, kind: input, shape index: {}]
  %s3 = inlined_call_operand.vmem [shape: f32[8,512], index: 3, kind: output, shape index: {}]
  %s4 = sld [smem:[#allocation0]]
  $region57: #{lenet5_forward.3} parent=0
    _
  %s6 = ssub.s32 1, %s4
  %s7 = scalar_select 0, %s6, %s4
  loop: start=0, step=1, limit=6
  $region2: #{lenet5_forward.3} parent=0 // loop_pre_header
    _
  $region3: #{lenet5_forward.3} parent=0 // loop_header
    %s9 = sphi 0, %s13
    %p10 = scmp.ge.s32.totalorder %s9, 6
    %s16 = sphi 0, %s28
    %s17 = sphi 0, %s24
    %s18 = sphi 0, %s16
    %s19 = sphi 0, %s17
    %s20 = sphi 0, %s18
    %s21 = sphi 0, %s19
    %s29 = sphi 0, %s29
    %s31 = sphi 0, %s29
    %s32 = sphi 0, %s31
    %s46 = sphi 0, %s32
    %s50 = sphi 0, %s50
    %s52 = sphi 0, %s50
    %s53 = sphi 0, %s52
    %s67 = sphi 0, %s53
    %s75 = sphi 0, %s77
    %s78 = sphi 0, %s75
    %s79 = sphi 0, %s78
    %s95 = sphi 0, %s79
    %s101 = sphi 0, %s103
    %s104 = sphi 0, %s101
    %s105 = sphi 0, %s104
    %s121 = sphi 0, %s105
  $region4: #{lenet5_forward.3} parent=0 // loop_header_branch
    %12 = sbr.rel (%p10) target = $region8
  $region5: #{lenet5_forward.3} parent=0 // loop_body
    %s14 = ssub.s32 %s9, 1
    %s15 = ssub.s32 %s9, 2
    %s22 = sadd.s32 1, %s17
    %p23 = scmp.ge.s32.totalorder %s22, 4
    %s24 = scalar_select %p23, 0, %s22
    %s25 = sadd.s32 1, %s16
    %s26 = scalar_select %p23, %s25, %s16
    %p27 = scmp.ge.s32.totalorder %s26, 1
    %s28 = scalar_select %p27, 0, %s26
    %s30 = sadd.s32 %s29, 1
    %p33 = scmp.eq.s32.totalorder %s9, 3
    %p34 = scmp.ne.s32.totalorder %s29, %s31
    %p35 = scmp.eq.s32.totalorder %s9, 0
    %p36 = por %p34, %p35
    %p37 = scmp.ne.s32.totalorder %s29, %s31
    %p38 = scmp.eq.s32.totalorder %s14, 3
    %p39 = por %p37, %p38
    %p40 = scmp.ne.s32.totalorder %s31, %s32
    %p41 = scmp.eq.s32.totalorder %s14, 0
    %p42 = por %p40, %p41
    %p43 = scmp.ne.s32.totalorder %s31, %s32
    %p44 = scmp.eq.s32.totalorder %s15, 3
    %p45 = por %p43, %p44
    %p47 = scmp.ne.s32.totalorder %s32, %s46
    %p48 = scmp.eq.s32.totalorder %s15, 0
    %p49 = por %p47, %p48
    %s51 = sadd.s32 %s50, 1
    %p54 = scmp.eq.s32.totalorder %s9, 3
    %p55 = scmp.ne.s32.totalorder %s50, %s52
    %p56 = scmp.eq.s32.totalorder %s9, 0
    %p57 = por %p55, %p56
    %p58 = scmp.ne.s32.totalorder %s50, %s52
    %p59 = scmp.eq.s32.totalorder %s14, 3
    %p60 = por %p58, %p59
    %p61 = scmp.ne.s32.totalorder %s52, %s53
    %p62 = scmp.eq.s32.totalorder %s14, 0
    %p63 = por %p61, %p62
    %p64 = scmp.ne.s32.totalorder %s52, %s53
    %p65 = scmp.eq.s32.totalorder %s15, 3
    %p66 = por %p64, %p65
    %p68 = scmp.ne.s32.totalorder %s53, %s67
    %p69 = scmp.eq.s32.totalorder %s15, 0
    %p70 = por %p68, %p69
    %s71 = ssub.s32 %s17, %s24
    %s72 = ssub.s32 %s16, %s28
    %s73 = sor.u32 %s71, %s72
    %p74 = scmp.eq.s32.totalorder %s73, 0
    %s76 = sadd.s32 %s75, 1
    %s77 = scalar_select %p74, %s75, %s76
    %p80 = pneg %p74
    %p81 = scmp.eq.s32.totalorder %s9, 3
    %p82 = por %p80, %p81
    %p83 = scmp.ne.s32.totalorder %s75, %s78
    %p84 = scmp.eq.s32.totalorder %s9, 0
    %p85 = por %p83, %p84
    %p86 = scmp.ne.s32.totalorder %s75, %s78
    %p87 = scmp.eq.s32.totalorder %s14, 3
    %p88 = por %p86, %p87
    %p89 = scmp.ne.s32.totalorder %s78, %s79
    %p90 = scmp.eq.s32.totalorder %s14, 0
    %p91 = por %p89, %p90
    %p92 = scmp.ne.s32.totalorder %s78, %s79
    %p93 = scmp.eq.s32.totalorder %s15, 3
    %p94 = por %p92, %p93
    %p96 = scmp.ne.s32.totalorder %s79, %s95
    %p97 = scmp.eq.s32.totalorder %s15, 0
    %p98 = por %p96, %p97
    %s99 = ssub.s32 %s16, %s28
    %p100 = scmp.eq.s32.totalorder %s99, 0
    %s102 = sadd.s32 %s101, 1
    %s103 = scalar_select %p100, %s101, %s102
    %p106 = pneg %p100
    %p107 = scmp.eq.s32.totalorder %s9, 3
    %p108 = por %p106, %p107
    %p109 = scmp.ne.s32.totalorder %s101, %s104
    %p110 = scmp.eq.s32.totalorder %s9, 0
    %p111 = por %p109, %p110
    %p112 = scmp.ne.s32.totalorder %s101, %s104
    %p113 = scmp.eq.s32.totalorder %s14, 3
    %p114 = por %p112, %p113
    %p115 = scmp.ne.s32.totalorder %s104, %s105
    %p116 = scmp.eq.s32.totalorder %s14, 0
    %p117 = por %p115, %p116
    %p118 = scmp.ne.s32.totalorder %s104, %s105
    %p119 = scmp.eq.s32.totalorder %s15, 3
    %p120 = por %p118, %p119
    %p122 = scmp.ne.s32.totalorder %s105, %s121
    %p123 = scmp.eq.s32.totalorder %s15, 0
    %p124 = por %p122, %p123
    %p125 = scmp.le.s32.totalorder 1, %s9
    %p126 = scmp.lt.s32.totalorder %s9, 5
    %p127 = pnand %p125, %p126
    %p128 = pneg %p127
    // Predicated region
    $region9: #{lenet5_forward.3} parent=5 // pred_check
      _
    $region10: #{lenet5_forward.3} parent=5 // pred_check_branch
      %130 = sbr.rel (%p127) target = $region12
    $region11: #{lenet5_forward.3} parent=5 // pred_region
      %s131 = ssub.s32 %s9, 1
      // Predicated region
      $region13: #{lenet5_forward.3} parent=11 // pred_check
        %p132 = pneg %p42
      $region14: #{lenet5_forward.3} parent=11 // pred_check_branch
        %134 = sbr.rel (%p132) target = $region16
      $region15: #{lenet5_forward.3} parent=11 // pred_region
        _
      $region16: #{lenet5_forward.3} parent=11 // pred_fallthru
        _
      // Predicated region
      $region17: #{lenet5_forward.3} parent=11 // pred_check
        %p135 = pneg %p63
      $region18: #{lenet5_forward.3} parent=11 // pred_check_branch
        %137 = sbr.rel (%p135) target = $region20
      $region19: #{lenet5_forward.3} parent=11 // pred_region
        _
      $region20: #{lenet5_forward.3} parent=11 // pred_fallthru
        _
    $region12: #{lenet5_forward.3} parent=5 // pred_fallthru
      _
    %p138 = scmp.lt.s32.totalorder %s9, 4
    // Predicated region
    $region21: #{lenet5_forward.3} parent=5 // pred_check
      %p139 = pneg %p138
    $region22: #{lenet5_forward.3} parent=5 // pred_check_branch
      %141 = sbr.rel (%p139) target = $region24
    $region23: #{lenet5_forward.3} parent=5 // pred_region
      // Predicated region
      $region25: #{lenet5_forward.3} parent=23 // pred_check
        %p142 = pneg %p85
      $region26: #{lenet5_forward.3} parent=23 // pred_check_branch
        %144 = sbr.rel (%p142) target = $region28
      $region27: #{lenet5_forward.3} parent=23 // pred_region
        %s145 = smul.u32 4, %s16
        %p146 = scmp.lt.s32.totalorder %s17, 3
        %s147 = scalar_select %p146, %s17, 3
        %p148 = scmp.lt.s32.totalorder %s145, 3
        %s149 = scalar_select %p148, %s145, 3
        %s150 = smul.addr %s147, 40
        %s151 = sadd.s32 %s149, %s150
        %s152 = smul.addr %s151, 8
        %s153 = scalar_lea.vmem %s2, %s152
        %s154 = smul.u32 4, %s16
      $region28: #{lenet5_forward.3} parent=23 // pred_fallthru
        _
    $region24: #{lenet5_forward.3} parent=5 // pred_fallthru
      _
    %p155 = scmp.le.s32.totalorder 1, %s9
    %p156 = scmp.lt.s32.totalorder %s9, 5
    %p157 = pnand %p155, %p156
    %p158 = pneg %p157
    // Predicated region
    $region29: #{lenet5_forward.3} parent=5 // pred_check
      _
    $region30: #{lenet5_forward.3} parent=5 // pred_check_branch
      %160 = sbr.rel (%p157) target = $region32
    $region31: #{lenet5_forward.3} parent=5 // pred_region
      %s161 = ssub.s32 %s9, 1
      %p162 = pneg %p42
      %p163 = pneg %p39
      %p164 = pneg %p63
      %p165 = pneg %p60
      %s166 = smul.u32 4, %s18
      %p167 = scmp.lt.s32.totalorder %s19, 3
      %s168 = scalar_select %p167, %s19, 3
      %p169 = scmp.lt.s32.totalorder %s166, 3
      %s170 = scalar_select %p169, %s166, 3
      %s171 = smul.addr %s168, 40
      %s172 = sadd.s32 %s170, %s171
      %s173 = smul.addr %s172, 8
      %s174 = scalar_lea.vmem %s2, %s173
      %p175 = pneg %p91
      %p176 = pneg %p88
      %p177 = pneg %p117
      %p178 = pneg %p114
      %s179 = smul.u32 4, %s18
      %p180 = scmp.lt.s32.totalorder %s179, 3
      %s181 = scalar_select %p180, %s179, 3
      %s182 = smul.addr %s181, 8
      %s183 = scalar_lea.vmem %s3, %s182
      %s184 = smul.u32 4, %s18
      %p185 = scmp.lt.s32.totalorder %s19, 3
      %s186 = scalar_select %p185, %s19, 3
      %p187 = scmp.lt.s32.totalorder %s184, 3
      %s188 = scalar_select %p187, %s184, 3
      %s189 = smul.addr %s186, 40
      %s190 = sadd.s32 %s188, %s189
      %s191 = smul.addr %s190, 8
      %s192 = scalar_lea.vmem %s2, %s191
      %s193 = smul.u32 4, %s18
      %s194 = smul.u32 4, %s18
      %p195 = scmp.lt.s32.totalorder %s194, 3
      %s196 = scalar_select %p195, %s194, 3
      %s197 = smul.addr %s196, 8
      %s198 = scalar_lea.vmem %s3, %s197
      %s199 = smul.u32 4, %s18
      %v200 = vld [vmem:[%s0] sm:$0xff]
      %v201 = vld [vmem:[%s192] sm:$0xff]
      %v202 = vld [vmem:[%s192 + $0x8] sm:$0xff]
      %v203 = vld [vmem:[%s192 + $0x10] sm:$0xff]
      %v204 = vld [vmem:[%s192 + $0x18] sm:$0xff]
      %v205 = vld [vmem:[%s192 + $0x20] sm:$0xff]
      %v206 = vld [vmem:[%s192 + $0x28] sm:$0xff]
      %v207 = vld [vmem:[%s192 + $0x30] sm:$0xff]
      %v208 = vld [vmem:[%s192 + $0x38] sm:$0xff]
      %v209 = vld [vmem:[%s192 + $0x40] sm:$0xff]
      %v210 = vld [vmem:[%s192 + $0x48] sm:$0xff]
      %v211 = vld [vmem:[%s192 + $0x50] sm:$0xff]
      %v212 = vld [vmem:[%s192 + $0x58] sm:$0xff]
      %v213 = vld [vmem:[%s192 + $0x60] sm:$0xff]
      %v214 = vld [vmem:[%s192 + $0x68] sm:$0xff]
      %v215 = vld [vmem:[%s192 + $0x70] sm:$0xff]
      %v216 = vld [vmem:[%s192 + $0x78] sm:$0xff]
      %v217 = vld [vmem:[%s192 + $0x80] sm:$0xff]
      %v218 = vld [vmem:[%s192 + $0x88] sm:$0xff]
      %v219 = vld [vmem:[%s192 + $0x90] sm:$0xff]
      %v220 = vld [vmem:[%s192 + $0x98] sm:$0xff]
      %v221 = vld [vmem:[%s192 + $0xa0] sm:$0xff]
      %v222 = vld [vmem:[%s192 + $0xa8] sm:$0xff]
      %v223 = vld [vmem:[%s192 + $0xb0] sm:$0xff]
      %v224 = vld [vmem:[%s192 + $0xb8] sm:$0xff]
      %v225 = vld [vmem:[%s192 + $0xc0] sm:$0xff]
      %v226 = vld [vmem:[%s192 + $0xc8] sm:$0xff]
      %v227 = vld [vmem:[%s192 + $0xd0] sm:$0xff]
      %v228 = vld [vmem:[%s192 + $0xd8] sm:$0xff]
      %v229 = vld [vmem:[%s192 + $0xe0] sm:$0xff]
      %v230 = vld [vmem:[%s192 + $0xe8] sm:$0xff]
      %v231 = vld [vmem:[%s192 + $0xf0] sm:$0xff]
      %v232 = vld [vmem:[%s192 + $0xf8] sm:$0xff]
      %v233 = vld [vmem:[%s192 + $0x100] sm:$0xff]
      %v234 = vld [vmem:[%s192 + $0x108] sm:$0xff]
      %v235 = vld [vmem:[%s192 + $0x110] sm:$0xff]
      %v236 = vld [vmem:[%s192 + $0x118] sm:$0xff]
      %v237 = vld [vmem:[%s192 + $0x120] sm:$0xff]
      %v238 = vld [vmem:[%s192 + $0x128] sm:$0xff]
      %v239 = vld [vmem:[%s192 + $0x130] sm:$0xff]
      %v240 = vld [vmem:[%s192 + $0x138] sm:$0xff]
      %v241 = vld [vmem:[%s1] sm:$0xff]
      %243 = vset.pattern.permute.xlu0 0
      %244 = vperm.xlu0 %243, %v241
      %v245 = vpop.permute.xlu0 %244
      %vm247 = vcmask 654336
      %v249 = vsel %vm247, %v200, 0
      %251 = vmatprep.subr.mxu0 0.0
      %252 = vmatpush1.msra.mxu0 0.0
      %253 = vmatprep.subr.mxu0 0.0
      %254 = vmatpush1.msra.mxu0 0.0
      %255 = vmatprep.subr.mxu0 0.0
      %256 = vmatpush1.msra.mxu0 0.0
      %257 = vmatprep.subr.mxu0 0.0
      %258 = vmatpush1.msra.mxu0 0.0
      %259 = vmatprep.subr.mxu0 0.0
      %260 = vmatpush1.msra.mxu0 0.0
      %261 = vmatprep.subr.mxu0 0.0
      %262 = vmatpush1.msra.mxu0 0.0
      %263 = vmatprep.subr.mxu0 %v238
      %264 = vmatpush1.msra.mxu0 %v237
      %265 = vmatprep.subr.mxu0 %v234
      %266 = vmatpush1.msra.mxu0 %v233
      %267 = vmatprep.subr.mxu0 %v230
      %268 = vmatpush1.msra.mxu0 %v229
      %269 = vmatprep.subr.mxu0 %v226
      %270 = vmatpush1.msra.mxu0 %v225
      %271 = vmatprep.subr.mxu0 %v222
      %272 = vmatpush1.msra.mxu0 %v221
      %273 = vmatprep.subr.mxu0 %v218
      %274 = vmatpush1.msra.mxu0 %v217
      %275 = vmatprep.subr.mxu0 %v214
      %276 = vmatpush1.msra.mxu0 %v213
      %277 = vmatprep.subr.mxu0 %v210
      %278 = vmatpush1.msra.mxu0 %v209
      %279 = vmatprep.subr.mxu0 %v206
      %280 = vmatpush1.msra.mxu0 %v205
      %281 = vmatprep.subr.mxu0 %v202
      %282 = vmatpush1.msra.mxu0 %v201
      %283 = vmatprep.subr.mxu0 0.0
      %284 = vmatpush2.msra.mxu0 0.0
      %285 = vmatprep.subr.mxu0 0.0
      %286 = vmatpush2.msra.mxu0 0.0
      %287 = vmatprep.subr.mxu0 0.0
      %288 = vmatpush2.msra.mxu0 0.0
      %289 = vmatprep.subr.mxu0 0.0
      %290 = vmatpush2.msra.mxu0 0.0
      %291 = vmatprep.subr.mxu0 0.0
      %292 = vmatpush2.msra.mxu0 0.0
      %293 = vmatprep.subr.mxu0 0.0
      %294 = vmatpush2.msra.mxu0 0.0
      %295 = vmatprep.subr.mxu0 0.0
      %296 = vmatpush2.msra.mxu0 0.0
      %297 = vmatprep.subr.mxu0 0.0
      %298 = vmatpush2.msra.mxu0 0.0
      %299 = vmatprep.subr.mxu0 0.0
      %300 = vmatpush2.msra.mxu0 0.0
      %301 = vmatprep.subr.mxu0 0.0
      %302 = vmatpush2.msra.mxu0 0.0
      %303 = vmatprep.subr.mxu0 0.0
      %304 = vmatpush2.msra.mxu0 0.0
      %305 = vmatprep.subr.mxu0 0.0
      %306 = vmatpush2.msra.mxu0 0.0
      %307 = vmatprep.subr.mxu0 0.0
      %308 = vmatpush2.msra.mxu0 0.0
      %309 = vmatprep.subr.mxu0 0.0
      %310 = vmatpush2.msra.mxu0 0.0
      %311 = vmatprep.subr.mxu0 0.0
      %312 = vmatpush2.msra.mxu0 0.0
      %313 = vmatprep.subr.mxu0 0.0
      %314 = vmatpush2.msra.mxu0 0.0
      %315 = vmatprep.mubr.f32.mxu0 0.0
      %316 = vmatmul.mubr.f32.gmra.mxu0 %v249
      %v317 = vpop.f32.mrf.mxu0
      %v318 = vadd.f32 %v245, %v317
      %v319 = vpop.f32.mrf.mxu0
      %v320 = vadd.f32 %v245, %v319
      %321 = vdwg.mxu0
      %322 = vmatprep.subr.mxu0 0.0
      %323 = vmatpush1.msra.mxu0 0.0
      %324 = vmatprep.subr.mxu0 0.0
      %325 = vmatpush1.msra.mxu0 0.0
      %326 = vmatprep.subr.mxu0 0.0
      %327 = vmatpush1.msra.mxu0 0.0
      %328 = vmatprep.subr.mxu0 0.0
      %329 = vmatpush1.msra.mxu0 0.0
      %330 = vmatprep.subr.mxu0 0.0
      %331 = vmatpush1.msra.mxu0 0.0
      %332 = vmatprep.subr.mxu0 0.0
      %333 = vmatpush1.msra.mxu0 0.0
      %334 = vmatprep.subr.mxu0 %v240
      %335 = vmatpush1.msra.mxu0 %v239
      %336 = vmatprep.subr.mxu0 %v236
      %337 = vmatpush1.msra.mxu0 %v235
      %338 = vmatprep.subr.mxu0 %v232
      %339 = vmatpush1.msra.mxu0 %v231
      %340 = vmatprep.subr.mxu0 %v228
      %341 = vmatpush1.msra.mxu0 %v227
      %342 = vmatprep.subr.mxu0 %v224
      %343 = vmatpush1.msra.mxu0 %v223
      %344 = vmatprep.subr.mxu0 %v220
      %345 = vmatpush1.msra.mxu0 %v219
      %346 = vmatprep.subr.mxu0 %v216
      %347 = vmatpush1.msra.mxu0 %v215
      %348 = vmatprep.subr.mxu0 %v212
      %349 = vmatpush1.msra.mxu0 %v211
      %350 = vmatprep.subr.mxu0 %v208
      %351 = vmatpush1.msra.mxu0 %v207
      %352 = vmatprep.subr.mxu0 %v204
      %353 = vmatpush1.msra.mxu0 %v203
      %354 = vmatprep.subr.mxu0 0.0
      %355 = vmatpush2.msra.mxu0 0.0
      %356 = vmatprep.subr.mxu0 0.0
      %357 = vmatpush2.msra.mxu0 0.0
      %358 = vmatprep.subr.mxu0 0.0
      %359 = vmatpush2.msra.mxu0 0.0
      %360 = vmatprep.subr.mxu0 0.0
      %361 = vmatpush2.msra.mxu0 0.0
      %362 = vmatprep.subr.mxu0 0.0
      %363 = vmatpush2.msra.mxu0 0.0
      %364 = vmatprep.subr.mxu0 0.0
      %365 = vmatpush2.msra.mxu0 0.0
      %366 = vmatprep.subr.mxu0 0.0
      %367 = vmatpush2.msra.mxu0 0.0
      %368 = vmatprep.subr.mxu0 0.0
      %369 = vmatpush2.msra.mxu0 0.0
      %370 = vmatprep.subr.mxu0 0.0
      %371 = vmatpush2.msra.mxu0 0.0
      %372 = vmatprep.subr.mxu0 0.0
      %373 = vmatpush2.msra.mxu0 0.0
      %374 = vmatprep.subr.mxu0 0.0
      %375 = vmatpush2.msra.mxu0 0.0
      %376 = vmatprep.subr.mxu0 0.0
      %377 = vmatpush2.msra.mxu0 0.0
      %378 = vmatprep.subr.mxu0 0.0
      %379 = vmatpush2.msra.mxu0 0.0
      %380 = vmatprep.subr.mxu0 0.0
      %381 = vmatpush2.msra.mxu0 0.0
      %382 = vmatprep.subr.mxu0 0.0
      %383 = vmatpush2.msra.mxu0 0.0
      %384 = vmatprep.subr.mxu0 0.0
      %385 = vmatpush2.msra.mxu0 0.0
      %386 = vmatprep.mubr.f32.mxu0 0.0
      %387 = vmatmul.mubr.f32.gmra.mxu0 %v249
      %v388 = vpop.f32.mrf.mxu0
      %v389 = vadd.f32 %v245, %v388
      %v390 = vpop.f32.mrf.mxu0
      %v391 = vadd.f32 %v245, %v390
      %392 = vdwg.mxu0
      %p393 = scmp.eq.s32.totalorder %s19, 0
      // Predicated region
      $region33: #{lenet5_forward.3} parent=31 // pred_check
        %p394 = pneg %p393
      $region34: #{lenet5_forward.3} parent=31 // pred_check_branch
        %396 = sbr.rel (%p394) target = $region36
      $region35: #{lenet5_forward.3} parent=31 // pred_region
        %397 = vst [vmem:[%s198] sm:$0xff] %v318
        %398 = vst [vmem:[%s198 + $0x8] sm:$0xff] %v320
        %399 = vst [vmem:[%s198 + $0x10] sm:$0xff] %v389
        %400 = vst [vmem:[%s198 + $0x18] sm:$0xff] %v391
      $region36: #{lenet5_forward.3} parent=31 // pred_fallthru
        _
      %p401 = scmp.gt.s32.totalorder %s19, 0
      // Predicated region
      $region37: #{lenet5_forward.3} parent=31 // pred_check
        %p402 = pneg %p401
      $region38: #{lenet5_forward.3} parent=31 // pred_check_branch
        %404 = sbr.rel (%p402) target = $region40
      $region39: #{lenet5_forward.3} parent=31 // pred_region
        %v405 = vld [vmem:[%s198] sm:$0xff]
        %v406 = vld [vmem:[%s198 + $0x8] sm:$0xff]
        %v407 = vld [vmem:[%s198 + $0x10] sm:$0xff]
        %v408 = vld [vmem:[%s198 + $0x18] sm:$0xff]
        %v409 = vmax.f32 %v405, %v318
        %v410 = vmax.f32 %v406, %v320
        %v411 = vmax.f32 %v407, %v389
        %v412 = vmax.f32 %v408, %v391
        %413 = vst [vmem:[%s198] sm:$0xff] %v409
        %414 = vst [vmem:[%s198 + $0x8] sm:$0xff] %v410
        %415 = vst [vmem:[%s198 + $0x10] sm:$0xff] %v411
        %416 = vst [vmem:[%s198 + $0x18] sm:$0xff] %v412
      $region40: #{lenet5_forward.3} parent=31 // pred_fallthru
        _
      %p417 = scmp.eq.s32.totalorder %s19, 3
      // Predicated region
      $region41: #{lenet5_forward.3} parent=31 // pred_check
        %p418 = pneg %p417
      $region42: #{lenet5_forward.3} parent=31 // pred_check_branch
        %420 = sbr.rel (%p418) target = $region44
      $region43: #{lenet5_forward.3} parent=31 // pred_region
        %v421 = vld [vmem:[%s198] sm:$0xff]
        %v422 = vld [vmem:[%s198 + $0x8] sm:$0xff]
        %v423 = vld [vmem:[%s198 + $0x10] sm:$0xff]
        %v424 = vld [vmem:[%s198 + $0x18] sm:$0xff]
        %v425 = vmax.f32 %v421, 0.0
        %v426 = vmax.f32 %v422, 0.0
        %v427 = vmax.f32 %v423, 0.0
        %v428 = vmax.f32 %v424, 0.0
        %429 = vst [vmem:[%s198] sm:$0xff] %v425
        %430 = vst [vmem:[%s198 + $0x8] sm:$0xff] %v426
        %431 = vst [vmem:[%s198 + $0x10] sm:$0xff] %v427
        %432 = vst [vmem:[%s198 + $0x18] sm:$0xff] %v428
      $region44: #{lenet5_forward.3} parent=31 // pred_fallthru
        _
      %s433 = smul.u32 4, %s18
      %p434 = scmp.lt.s32.totalorder %s433, 3
      %s435 = scalar_select %p434, %s433, 3
      %s436 = smul.addr %s435, 8
      %s437 = scalar_lea.vmem %s3, %s436
      // Predicated region
      $region45: #{lenet5_forward.3} parent=31 // pred_check
        %p438 = pneg %p114
      $region46: #{lenet5_forward.3} parent=31 // pred_check_branch
        %440 = sbr.rel (%p438) target = $region48
      $region47: #{lenet5_forward.3} parent=31 // pred_region
        %s441 = smul.u32 4, %s18
      $region48: #{lenet5_forward.3} parent=31 // pred_fallthru
        _
      // Predicated region
      $region49: #{lenet5_forward.3} parent=31 // pred_check
        %p442 = pneg %p114
      $region50: #{lenet5_forward.3} parent=31 // pred_check_branch
        %444 = sbr.rel (%p442) target = $region52
      $region51: #{lenet5_forward.3} parent=31 // pred_region
        %s445 = smul.u32 4, %s18
        %p446 = scmp.lt.s32.totalorder %s445, 3
        %s447 = scalar_select %p446, %s445, 3
        %s448 = smul.addr %s447, 8
        %s449 = scalar_lea.vmem %s3, %s448
      $region52: #{lenet5_forward.3} parent=31 // pred_fallthru
        _
    $region32: #{lenet5_forward.3} parent=5 // pred_fallthru
      _
    %p450 = scmp.le.s32.totalorder 2, %s9
    // Predicated region
    $region53: #{lenet5_forward.3} parent=5 // pred_check
      %p451 = pneg %p450
    $region54: #{lenet5_forward.3} parent=5 // pred_check_branch
      %453 = sbr.rel (%p451) target = $region56
    $region55: #{lenet5_forward.3} parent=5 // pred_region
      %s454 = ssub.s32 %s9, 2
    $region56: #{lenet5_forward.3} parent=5 // pred_fallthru
      _
  $region6: #{lenet5_forward.3} parent=0 // loop_footer
    %s13 = sadd.s32 1, %s9
  $region7: #{lenet5_forward.3} parent=0 // loop_footer_branch
    %8 = sbr.rel target = $region3
  $region8: #{lenet5_forward.3} parent=0 // loop_exit
    _

// kernel: lenet5_forward.4
$region0: #{lenet5_forward.4}
  #allocation0 [shape = 'u32[]', space=smem, size = 0x4, offset = 0x4, fixed_abs, tag = 'smem constant byte address 0x4 - core index']
  #allocation1 [shape = 'u32[144,128]{1,0:T(1,128)}', space=vmem, size = 0x12000, scoped, tag = 'internal scratch']
  %s0 = inlined_call_operand.vmem [shape: f32[16,152], index: 0, kind: input, shape index: {}]
  %s1 = inlined_call_operand.vmem [shape: f32[16,1], index: 1, kind: input, shape index: {}]
  %s2 = inlined_call_operand.vmem [shape: f32[4,152,128], index: 2, kind: input, shape index: {}]
  %s3 = inlined_call_operand.vmem [shape: f32[16,128], index: 3, kind: output, shape index: {}]
  %s4 = sld [smem:[#allocation0]]
  $region57: #{lenet5_forward.4} parent=0
    _
  %s6 = ssub.s32 1, %s4
  %s7 = scalar_select 0, %s6, %s4
  loop: start=0, step=1, limit=6
  $region2: #{lenet5_forward.4} parent=0 // loop_pre_header
    _
  $region3: #{lenet5_forward.4} parent=0 // loop_header
    %s9 = sphi 0, %s13
    %p10 = scmp.ge.s32.totalorder %s9, 6
    %s16 = sphi 0, %s28
    %s17 = sphi 0, %s24
    %s18 = sphi 0, %s16
    %s19 = sphi 0, %s17
    %s20 = sphi 0, %s18
    %s21 = sphi 0, %s19
    %s29 = sphi 0, %s29
    %s31 = sphi 0, %s29
    %s32 = sphi 0, %s31
    %s46 = sphi 0, %s32
    %s50 = sphi 0, %s50
    %s52 = sphi 0, %s50
    %s53 = sphi 0, %s52
    %s67 = sphi 0, %s53
    %s75 = sphi 0, %s77
    %s78 = sphi 0, %s75
    %s79 = sphi 0, %s78
    %s95 = sphi 0, %s79
    %s101 = sphi 0, %s103
    %s104 = sphi 0, %s101
    %s105 = sphi 0, %s104
    %s121 = sphi 0, %s105
  $region4: #{lenet5_forward.4} parent=0 // loop_header_branch
    %12 = sbr.rel (%p10) target = $region8
  $region5: #{lenet5_forward.4} parent=0 // loop_body
    %s14 = ssub.s32 %s9, 1
    %s15 = ssub.s32 %s9, 2
    %s22 = sadd.s32 1, %s17
    %p23 = scmp.ge.s32.totalorder %s22, 4
    %s24 = scalar_select %p23, 0, %s22
    %s25 = sadd.s32 1, %s16
    %s26 = scalar_select %p23, %s25, %s16
    %p27 = scmp.ge.s32.totalorder %s26, 1
    %s28 = scalar_select %p27, 0, %s26
    %s30 = sadd.s32 %s29, 1
    %p33 = scmp.eq.s32.totalorder %s9, 3
    %p34 = scmp.ne.s32.totalorder %s29, %s31
    %p35 = scmp.eq.s32.totalorder %s9, 0
    %p36 = por %p34, %p35
    %p37 = scmp.ne.s32.totalorder %s29, %s31
    %p38 = scmp.eq.s32.totalorder %s14, 3
    %p39 = por %p37, %p38
    %p40 = scmp.ne.s32.totalorder %s31, %s32
    %p41 = scmp.eq.s32.totalorder %s14, 0
    %p42 = por %p40, %p41
    %p43 = scmp.ne.s32.totalorder %s31, %s32
    %p44 = scmp.eq.s32.totalorder %s15, 3
    %p45 = por %p43, %p44
    %p47 = scmp.ne.s32.totalorder %s32, %s46
    %p48 = scmp.eq.s32.totalorder %s15, 0
    %p49 = por %p47, %p48
    %s51 = sadd.s32 %s50, 1
    %p54 = scmp.eq.s32.totalorder %s9, 3
    %p55 = scmp.ne.s32.totalorder %s50, %s52
    %p56 = scmp.eq.s32.totalorder %s9, 0
    %p57 = por %p55, %p56
    %p58 = scmp.ne.s32.totalorder %s50, %s52
    %p59 = scmp.eq.s32.totalorder %s14, 3
    %p60 = por %p58, %p59
    %p61 = scmp.ne.s32.totalorder %s52, %s53
    %p62 = scmp.eq.s32.totalorder %s14, 0
    %p63 = por %p61, %p62
    %p64 = scmp.ne.s32.totalorder %s52, %s53
    %p65 = scmp.eq.s32.totalorder %s15, 3
    %p66 = por %p64, %p65
    %p68 = scmp.ne.s32.totalorder %s53, %s67
    %p69 = scmp.eq.s32.totalorder %s15, 0
    %p70 = por %p68, %p69
    %s71 = ssub.s32 %s17, %s24
    %s72 = ssub.s32 %s16, %s28
    %s73 = sor.u32 %s71, %s72
    %p74 = scmp.eq.s32.totalorder %s73, 0
    %s76 = sadd.s32 %s75, 1
    %s77 = scalar_select %p74, %s75, %s76
    %p80 = pneg %p74
    %p81 = scmp.eq.s32.totalorder %s9, 3
    %p82 = por %p80, %p81
    %p83 = scmp.ne.s32.totalorder %s75, %s78
    %p84 = scmp.eq.s32.totalorder %s9, 0
    %p85 = por %p83, %p84
    %p86 = scmp.ne.s32.totalorder %s75, %s78
    %p87 = scmp.eq.s32.totalorder %s14, 3
    %p88 = por %p86, %p87
    %p89 = scmp.ne.s32.totalorder %s78, %s79
    %p90 = scmp.eq.s32.totalorder %s14, 0
    %p91 = por %p89, %p90
    %p92 = scmp.ne.s32.totalorder %s78, %s79
    %p93 = scmp.eq.s32.totalorder %s15, 3
    %p94 = por %p92, %p93
    %p96 = scmp.ne.s32.totalorder %s79, %s95
    %p97 = scmp.eq.s32.totalorder %s15, 0
    %p98 = por %p96, %p97
    %s99 = ssub.s32 %s16, %s28
    %p100 = scmp.eq.s32.totalorder %s99, 0
    %s102 = sadd.s32 %s101, 1
    %s103 = scalar_select %p100, %s101, %s102
    %p106 = pneg %p100
    %p107 = scmp.eq.s32.totalorder %s9, 3
    %p108 = por %p106, %p107
    %p109 = scmp.ne.s32.totalorder %s101, %s104
    %p110 = scmp.eq.s32.totalorder %s9, 0
    %p111 = por %p109, %p110
    %p112 = scmp.ne.s32.totalorder %s101, %s104
    %p113 = scmp.eq.s32.totalorder %s14, 3
    %p114 = por %p112, %p113
    %p115 = scmp.ne.s32.totalorder %s104, %s105
    %p116 = scmp.eq.s32.totalorder %s14, 0
    %p117 = por %p115, %p116
    %p118 = scmp.ne.s32.totalorder %s104, %s105
    %p119 = scmp.eq.s32.totalorder %s15, 3
    %p120 = por %p118, %p119
    %p122 = scmp.ne.s32.totalorder %s105, %s121
    %p123 = scmp.eq.s32.totalorder %s15, 0
    %p124 = por %p122, %p123
    %p125 = scmp.le.s32.totalorder 1, %s9
    %p126 = scmp.lt.s32.totalorder %s9, 5
    %p127 = pnand %p125, %p126
    %p128 = pneg %p127
    // Predicated region
    $region9: #{lenet5_forward.4} parent=5 // pred_check
      _
    $region10: #{lenet5_forward.4} parent=5 // pred_check_branch
      %130 = sbr.rel (%p127) target = $region12
    $region11: #{lenet5_forward.4} parent=5 // pred_region
      %s131 = ssub.s32 %s9, 1
      // Predicated region
      $region13: #{lenet5_forward.4} parent=11 // pred_check
        %p132 = pneg %p42
      $region14: #{lenet5_forward.4} parent=11 // pred_check_branch
        %134 = sbr.rel (%p132) target = $region16
      $region15: #{lenet5_forward.4} parent=11 // pred_region
        _
      $region16: #{lenet5_forward.4} parent=11 // pred_fallthru
        _
      // Predicated region
      $region17: #{lenet5_forward.4} parent=11 // pred_check
        %p135 = pneg %p63
      $region18: #{lenet5_forward.4} parent=11 // pred_check_branch
        %137 = sbr.rel (%p135) target = $region20
      $region19: #{lenet5_forward.4} parent=11 // pred_region
        _
      $region20: #{lenet5_forward.4} parent=11 // pred_fallthru
        _
    $region12: #{lenet5_forward.4} parent=5 // pred_fallthru
      _
    %p138 = scmp.lt.s32.totalorder %s9, 4
    // Predicated region
    $region21: #{lenet5_forward.4} parent=5 // pred_check
      %p139 = pneg %p138
    $region22: #{lenet5_forward.4} parent=5 // pred_check_branch
      %141 = sbr.rel (%p139) target = $region24
    $region23: #{lenet5_forward.4} parent=5 // pred_region
      // Predicated region
      $region25: #{lenet5_forward.4} parent=23 // pred_check
        %p142 = pneg %p85
      $region26: #{lenet5_forward.4} parent=23 // pred_check_branch
        %144 = sbr.rel (%p142) target = $region28
      $region27: #{lenet5_forward.4} parent=23 // pred_region
        %p145 = scmp.lt.s32.totalorder %s17, 3
        %s146 = scalar_select %p145, %s17, 3
        %p147 = scmp.lt.s32.totalorder %s16, 0
        %s148 = scalar_select %p147, %s16, 0
        %s149 = smul.addr %s146, 19
        %s150 = sadd.s32 %s148, %s149
        %s151 = smul.addr %s150, 8
        %s152 = scalar_lea.vmem %s2, %s151
      $region28: #{lenet5_forward.4} parent=23 // pred_fallthru
        _
    $region24: #{lenet5_forward.4} parent=5 // pred_fallthru
      _
    %p153 = scmp.le.s32.totalorder 1, %s9
    %p154 = scmp.lt.s32.totalorder %s9, 5
    %p155 = pnand %p153, %p154
    %p156 = pneg %p155
    // Predicated region
    $region29: #{lenet5_forward.4} parent=5 // pred_check
      _
    $region30: #{lenet5_forward.4} parent=5 // pred_check_branch
      %158 = sbr.rel (%p155) target = $region32
    $region31: #{lenet5_forward.4} parent=5 // pred_region
      %s159 = ssub.s32 %s9, 1
      %p160 = pneg %p42
      %p161 = pneg %p39
      %p162 = pneg %p63
      %p163 = pneg %p60
      %p164 = scmp.lt.s32.totalorder %s19, 3
      %s165 = scalar_select %p164, %s19, 3
      %p166 = scmp.lt.s32.totalorder %s18, 0
      %s167 = scalar_select %p166, %s18, 0
      %s168 = smul.addr %s165, 19
      %s169 = sadd.s32 %s167, %s168
      %s170 = smul.addr %s169, 8
      %s171 = scalar_lea.vmem %s2, %s170
      %p172 = pneg %p91
      %p173 = pneg %p88
      %p174 = pneg %p117
      %p175 = pneg %p114
      %p176 = scmp.lt.s32.totalorder %s18, 0
      %s177 = scalar_select %p176, %s18, 0
      %s178 = smul.addr %s177, 8
      %s179 = scalar_lea.vmem %s3, %s178
      %p180 = scmp.lt.s32.totalorder %s19, 3
      %s181 = scalar_select %p180, %s19, 3
      %p182 = scmp.lt.s32.totalorder %s18, 0
      %s183 = scalar_select %p182, %s18, 0
      %s184 = smul.addr %s181, 19
      %s185 = sadd.s32 %s183, %s184
      %s186 = smul.addr %s185, 8
      %s187 = scalar_lea.vmem %s2, %s186
      %p188 = scmp.lt.s32.totalorder %s18, 0
      %s189 = scalar_select %p188, %s18, 0
      %s190 = smul.addr %s189, 8
      %s191 = scalar_lea.vmem %s3, %s190
      %v192 = vld [vmem:[%s0] sm:$0xff]
      %v193 = vld [vmem:[%s0 + $0x8] sm:$0xff]
      %v194 = vld [vmem:[%s0 + $0x10] sm:$0xff]
      %v195 = vld [vmem:[%s0 + $0x18] sm:$0xff]
      %v196 = vld [vmem:[%s187] sm:$0xff]
      %v197 = vld [vmem:[%s187 + $0x8] sm:$0xff]
      %v198 = vld [vmem:[%s187 + $0x10] sm:$0xff]
      %v199 = vld [vmem:[%s187 + $0x18] sm:$0xff]
      %v200 = vld [vmem:[%s187 + $0x20] sm:$0xff]
      %v201 = vld [vmem:[%s187 + $0x28] sm:$0xff]
      %v202 = vld [vmem:[%s187 + $0x30] sm:$0xff]
      %v203 = vld [vmem:[%s187 + $0x38] sm:$0xff]
      %v204 = vld [vmem:[%s187 + $0x40] sm:$0xff]
      %v205 = vld [vmem:[%s187 + $0x48] sm:$0xff]
      %v206 = vld [vmem:[%s187 + $0x50] sm:$0xff]
      %v207 = vld [vmem:[%s187 + $0x58] sm:$0xff]
      %v208 = vld [vmem:[%s187 + $0x60] sm:$0xff]
      %v209 = vld [vmem:[%s187 + $0x68] sm:$0xff]
      %v210 = vld [vmem:[%s187 + $0x70] sm:$0xff]
      %v211 = vld [vmem:[%s187 + $0x78] sm:$0xff]
      %v212 = vld [vmem:[%s187 + $0x80] sm:$0xff]
      %v213 = vld [vmem:[%s187 + $0x88] sm:$0xff]
      %v214 = vld [vmem:[%s187 + $0x90] sm:$0xff]
      %v215 = vld [vmem:[%s1] sm:$0xff]
      %v216 = vld [vmem:[%s1 + $0x8] sm:$0xff]
      %218 = vset.pattern.permute.xlu0 0
      %219 = vperm.xlu0 %218, %v215
      %v220 = vpop.permute.xlu0 %219
      %223 = vset.pattern.permute.xlu0 0
      %224 = vperm.xlu0 %223, %v216
      %v225 = vpop.permute.xlu0 %224
      %vm227 = vcmask 195584
      %v229 = vsel %vm227, %v193, 0
      %v232 = vsel %vm227, %v195, 0
      %234 = vmatprep.subr.mxu0 0.0
      %235 = vmatpush1.msra.mxu0 %v211
      %236 = vmatprep.subr.mxu0 0.0
      %237 = vmatpush1.msra.mxu0 %v210
      %238 = vmatprep.subr.mxu0 0.0
      %239 = vmatpush1.msra.mxu0 %v209
      %240 = vmatprep.subr.mxu0 0.0
      %241 = vmatpush1.msra.mxu0 %v208
      %242 = vmatprep.subr.mxu0 0.0
      %243 = vmatpush1.msra.mxu0 %v207
      %244 = vmatprep.subr.mxu0 0.0
      %245 = vmatpush1.msra.mxu0 %v206
      %246 = vmatprep.subr.mxu0 0.0
      %247 = vmatpush1.msra.mxu0 %v205
      %248 = vmatprep.subr.mxu0 0.0
      %249 = vmatpush1.msra.mxu0 %v204
      %250 = vmatprep.subr.mxu0 0.0
      %251 = vmatpush1.msra.mxu0 %v203
      %252 = vmatprep.subr.mxu0 0.0
      %253 = vmatpush1.msra.mxu0 %v202
      %254 = vmatprep.subr.mxu0 0.0
      %255 = vmatpush1.msra.mxu0 %v201
      %256 = vmatprep.subr.mxu0 0.0
      %257 = vmatpush1.msra.mxu0 %v200
      %258 = vmatprep.subr.mxu0 0.0
      %259 = vmatpush1.msra.mxu0 %v199
      %260 = vmatprep.subr.mxu0 0.0
      %261 = vmatpush1.msra.mxu0 %v198
      %262 = vmatprep.subr.mxu0 0.0
      %263 = vmatpush1.msra.mxu0 %v197
      %264 = vmatprep.subr.mxu0 0.0
      %265 = vmatpush1.msra.mxu0 %v196
      %266 = vmatprep.subr.mxu0 0.0
      %267 = vmatpush2.msra.mxu0 0.0
      %268 = vmatprep.subr.mxu0 0.0
      %269 = vmatpush2.msra.mxu0 0.0
      %270 = vmatprep.subr.mxu0 0.0
      %271 = vmatpush2.msra.mxu0 0.0
      %272 = vmatprep.subr.mxu0 0.0
      %273 = vmatpush2.msra.mxu0 0.0
      %274 = vmatprep.subr.mxu0 0.0
      %275 = vmatpush2.msra.mxu0 0.0
      %276 = vmatprep.subr.mxu0 0.0
      %277 = vmatpush2.msra.mxu0 0.0
      %278 = vmatprep.subr.mxu0 0.0
      %279 = vmatpush2.msra.mxu0 0.0
      %280 = vmatprep.subr.mxu0 0.0
      %281 = vmatpush2.msra.mxu0 0.0
      %282 = vmatprep.subr.mxu0 0.0
      %283 = vmatpush2.msra.mxu0 0.0
      %284 = vmatprep.subr.mxu0 0.0
      %285 = vmatpush2.msra.mxu0 0.0
      %286 = vmatprep.subr.mxu0 0.0
      %287 = vmatpush2.msra.mxu0 0.0
      %288 = vmatprep.subr.mxu0 0.0
      %289 = vmatpush2.msra.mxu0 0.0
      %290 = vmatprep.subr.mxu0 0.0
      %291 = vmatpush2.msra.mxu0 0.0
      %292 = vmatprep.subr.mxu0 0.0
      %293 = vmatpush2.msra.mxu0 %v214
      %294 = vmatprep.subr.mxu0 0.0
      %295 = vmatpush2.msra.mxu0 %v213
      %296 = vmatprep.subr.mxu0 0.0
      %297 = vmatpush2.msra.mxu0 %v212
      %298 = vmatprep.mubr.f32.mxu0 %v229
      %299 = vmatmul.mubr.f32.gmra.mxu0 %v192
      %v300 = vpop.f32.mrf.mxu0
      %v301 = vadd.f32 %v220, %v300
      %v302 = vpop.f32.mrf.mxu0
      %303 = vmatprep.mubr.f32.mxu0 %v232
      %304 = vmatmul.mubr.f32.gmra.mxu0 %v194
      %v305 = vpop.f32.mrf.mxu0
      %v306 = vadd.f32 %v225, %v305
      %v307 = vpop.f32.mrf.mxu0
      %308 = vdwg.mxu0
      %p309 = scmp.eq.s32.totalorder %s19, 0
      // Predicated region
      $region33: #{lenet5_forward.4} parent=31 // pred_check
        %p310 = pneg %p309
      $region34: #{lenet5_forward.4} parent=31 // pred_check_branch
        %312 = sbr.rel (%p310) target = $region36
      $region35: #{lenet5_forward.4} parent=31 // pred_region
        %313 = vst [vmem:[%s191] sm:$0xff] %v301
        %314 = vst [vmem:[%s191 + $0x8] sm:$0xff] %v306
      $region36: #{lenet5_forward.4} parent=31 // pred_fallthru
        _
      %p315 = scmp.gt.s32.totalorder %s19, 0
      // Predicated region
      $region37: #{lenet5_forward.4} parent=31 // pred_check
        %p316 = pneg %p315
      $region38: #{lenet5_forward.4} parent=31 // pred_check_branch
        %318 = sbr.rel (%p316) target = $region40
      $region39: #{lenet5_forward.4} parent=31 // pred_region
        %v319 = vld [vmem:[%s191] sm:$0xff]
        %v320 = vld [vmem:[%s191 + $0x8] sm:$0xff]
        %v321 = vmax.f32 %v319, %v301
        %v322 = vmax.f32 %v320, %v306
        %323 = vst [vmem:[%s191] sm:$0xff] %v321
        %324 = vst [vmem:[%s191 + $0x8] sm:$0xff] %v322
      $region40: #{lenet5_forward.4} parent=31 // pred_fallthru
        _
      %p325 = scmp.eq.s32.totalorder %s19, 3
      // Predicated region
      $region41: #{lenet5_forward.4} parent=31 // pred_check
        %p326 = pneg %p325
      $region42: #{lenet5_forward.4} parent=31 // pred_check_branch
        %328 = sbr.rel (%p326) target = $region44
      $region43: #{lenet5_forward.4} parent=31 // pred_region
        %v329 = vld [vmem:[%s191] sm:$0xff]
        %v330 = vld [vmem:[%s191 + $0x8] sm:$0xff]
        %v331 = vmax.f32 %v329, 0.0
        %v332 = vmax.f32 %v330, 0.0
        %333 = vst [vmem:[%s191] sm:$0xff] %v331
        %334 = vst [vmem:[%s191 + $0x8] sm:$0xff] %v332
      $region44: #{lenet5_forward.4} parent=31 // pred_fallthru
        _
      %p335 = scmp.lt.s32.totalorder %s18, 0
      %s336 = scalar_select %p335, %s18, 0
      %s337 = smul.addr %s336, 8
      %s338 = scalar_lea.vmem %s3, %s337
      // Predicated region
      $region45: #{lenet5_forward.4} parent=31 // pred_check
        %p339 = pneg %p114
      $region46: #{lenet5_forward.4} parent=31 // pred_check_branch
        %341 = sbr.rel (%p339) target = $region48
      $region47: #{lenet5_forward.4} parent=31 // pred_region
        _
      $region48: #{lenet5_forward.4} parent=31 // pred_fallthru
        _
      // Predicated region
      $region49: #{lenet5_forward.4} parent=31 // pred_check
        %p342 = pneg %p114
      $region50: #{lenet5_forward.4} parent=31 // pred_check_branch
        %344 = sbr.rel (%p342) target = $region52
      $region51: #{lenet5_forward.4} parent=31 // pred_region
        %p345 = scmp.lt.s32.totalorder %s18, 0
        %s346 = scalar_select %p345, %s18, 0
        %s347 = smul.addr %s346, 8
        %s348 = scalar_lea.vmem %s3, %s347
      $region52: #{lenet5_forward.4} parent=31 // pred_fallthru
        _
    $region32: #{lenet5_forward.4} parent=5 // pred_fallthru
      _
    %p349 = scmp.le.s32.totalorder 2, %s9
    // Predicated region
    $region53: #{lenet5_forward.4} parent=5 // pred_check
      %p350 = pneg %p349
    $region54: #{lenet5_forward.4} parent=5 // pred_check_branch
      %352 = sbr.rel (%p350) target = $region56
    $region55: #{lenet5_forward.4} parent=5 // pred_region
      %s353 = ssub.s32 %s9, 2
    $region56: #{lenet5_forward.4} parent=5 // pred_fallthru
      _
  $region6: #{lenet5_forward.4} parent=0 // loop_footer
    %s13 = sadd.s32 1, %s9
  $region7: #{lenet5_forward.4} parent=0 // loop_footer_branch
    %8 = sbr.rel target = $region3
  $region8: #{lenet5_forward.4} parent=0 // loop_exit
    _

// kernel: lenet5_forward.5
$region0: #{lenet5_forward.5}
  #allocation0 [shape = 'u32[]', space=smem, size = 0x4, offset = 0x4, fixed_abs, tag = 'smem constant byte address 0x4 - core index']
  #allocation1 [shape = 'u32[144,128]{1,0:T(1,128)}', space=vmem, size = 0x12000, scoped, tag = 'internal scratch']
  %s0 = inlined_call_operand.vmem [shape: f32[400,128], index: 0, kind: input, shape index: {}]
  %s1 = inlined_call_operand.vmem [shape: f32[120,400], index: 1, kind: input, shape index: {}]
  %s2 = inlined_call_operand.vmem [shape: f32[120,1], index: 2, kind: input, shape index: {}]
  %s3 = inlined_call_operand.vmem [shape: f32[88,120], index: 3, kind: input, shape index: {}]
  %s4 = inlined_call_operand.vmem [shape: f32[88,1], index: 4, kind: input, shape index: {}]
  %s5 = inlined_call_operand.vmem [shape: f32[16,88], index: 5, kind: input, shape index: {}]
  %s6 = inlined_call_operand.vmem [shape: f32[16,1], index: 6, kind: input, shape index: {}]
  %s7 = inlined_call_operand.vmem [shape: f32[16,128], index: 7, kind: output, shape index: {}]
  %s8 = sld [smem:[#allocation0]]
  $region38: #{lenet5_forward.5} parent=0
    _
  %s10 = ssub.s32 1, %s8
  %s11 = scalar_select 0, %s10, %s8
  // Predicated region
  $region2: #{lenet5_forward.5} parent=0 // pred_check
    _
  $region3: #{lenet5_forward.5} parent=0 // pred_check_branch
    %13 = sbr.rel (0) target = $region5
  $region4: #{lenet5_forward.5} parent=0 // pred_region
    _
  $region5: #{lenet5_forward.5} parent=0 // pred_fallthru
    _
  // Predicated region
  $region6: #{lenet5_forward.5} parent=0 // pred_check
    _
  $region7: #{lenet5_forward.5} parent=0 // pred_check_branch
    %15 = sbr.rel (0) target = $region9
  $region8: #{lenet5_forward.5} parent=0 // pred_region
    _
  $region9: #{lenet5_forward.5} parent=0 // pred_fallthru
    _
  // Predicated region
  $region10: #{lenet5_forward.5} parent=0 // pred_check
    _
  $region11: #{lenet5_forward.5} parent=0 // pred_check_branch
    %17 = sbr.rel (0) target = $region13
  $region12: #{lenet5_forward.5} parent=0 // pred_region
    _
  $region13: #{lenet5_forward.5} parent=0 // pred_fallthru
    _
  // Predicated region
  $region14: #{lenet5_forward.5} parent=0 // pred_check
    _
  $region15: #{lenet5_forward.5} parent=0 // pred_check_branch
    %19 = sbr.rel (0) target = $region17
  $region16: #{lenet5_forward.5} parent=0 // pred_region
    _
  $region17: #{lenet5_forward.5} parent=0 // pred_fallthru
    _
  // Predicated region
  $region18: #{lenet5_forward.5} parent=0 // pred_check
    _
  $region19: #{lenet5_forward.5} parent=0 // pred_check_branch
    %21 = sbr.rel (0) target = $region21
  $region20: #{lenet5_forward.5} parent=0 // pred_region
    _
  $region21: #{lenet5_forward.5} parent=0 // pred_fallthru
    _
  // Predicated region
  $region22: #{lenet5_forward.5} parent=0 // pred_check
    _
  $region23: #{lenet5_forward.5} parent=0 // pred_check_branch
    %23 = sbr.rel (0) target = $region25
  $region24: #{lenet5_forward.5} parent=0 // pred_region
    _
  $region25: #{lenet5_forward.5} parent=0 // pred_fallthru
    _
  // Predicated region
  $region26: #{lenet5_forward.5} parent=0 // pred_check
    _
  $region27: #{lenet5_forward.5} parent=0 // pred_check_branch
    %25 = sbr.rel (0) target = $region29
  $region28: #{lenet5_forward.5} parent=0 // pred_region
    _
  $region29: #{lenet5_forward.5} parent=0 // pred_fallthru
    _
  %v26 = vld [vmem:[%s1] sm:$0xff]
  %v27 = vld [vmem:[%s1 + $0x8] sm:$0xff]
  %v28 = vld [vmem:[%s1 + $0x10] sm:$0xff]
  %v29 = vld [vmem:[%s1 + $0x18] sm:$0xff]
  %v30 = vld [vmem:[%s1 + $0x20] sm:$0xff]
  %v31 = vld [vmem:[%s1 + $0x28] sm:$0xff]
  %v32 = vld [vmem:[%s1 + $0x30] sm:$0xff]
  %v33 = vld [vmem:[%s1 + $0x38] sm:$0xff]
  %v34 = vld [vmem:[%s1 + $0x40] sm:$0xff]
  %v35 = vld [vmem:[%s1 + $0x48] sm:$0xff]
  %v36 = vld [vmem:[%s1 + $0x50] sm:$0xff]
  %v37 = vld [vmem:[%s1 + $0x58] sm:$0xff]
  %v38 = vld [vmem:[%s1 + $0x60] sm:$0xff]
  %v39 = vld [vmem:[%s1 + $0x68] sm:$0xff]
  %v40 = vld [vmem:[%s1 + $0x70] sm:$0xff]
  %v41 = vld [vmem:[%s1 + $0x78] sm:$0xff]
  %v42 = vld [vmem:[%s1 + $0x80] sm:$0xff]
  %v43 = vld [vmem:[%s1 + $0x88] sm:$0xff]
  %v44 = vld [vmem:[%s1 + $0x90] sm:$0xff]
  %v45 = vld [vmem:[%s1 + $0x98] sm:$0xff]
  %v46 = vld [vmem:[%s1 + $0xa0] sm:$0xff]
  %v47 = vld [vmem:[%s1 + $0xa8] sm:$0xff]
  %v48 = vld [vmem:[%s1 + $0xb0] sm:$0xff]
  %v49 = vld [vmem:[%s1 + $0xb8] sm:$0xff]
  %v50 = vld [vmem:[%s1 + $0xc0] sm:$0xff]
  %v51 = vld [vmem:[%s1 + $0xc8] sm:$0xff]
  %v52 = vld [vmem:[%s1 + $0xd0] sm:$0xff]
  %v53 = vld [vmem:[%s1 + $0xd8] sm:$0xff]
  %v54 = vld [vmem:[%s1 + $0xe0] sm:$0xff]
  %v55 = vld [vmem:[%s1 + $0xe8] sm:$0xff]
  %v56 = vld [vmem:[%s1 + $0xf0] sm:$0xff]
  %v57 = vld [vmem:[%s1 + $0xf8] sm:$0xff]
  %v58 = vld [vmem:[%s1 + $0x100] sm:$0xff]
  %v59 = vld [vmem:[%s1 + $0x108] sm:$0xff]
  %v60 = vld [vmem:[%s1 + $0x110] sm:$0xff]
  %v61 = vld [vmem:[%s1 + $0x118] sm:$0xff]
  %v62 = vld [vmem:[%s1 + $0x120] sm:$0xff]
  %v63 = vld [vmem:[%s1 + $0x128] sm:$0xff]
  %v64 = vld [vmem:[%s1 + $0x130] sm:$0xff]
  %v65 = vld [vmem:[%s1 + $0x138] sm:$0xff]
  %v66 = vld [vmem:[%s1 + $0x140] sm:$0xff]
  %v67 = vld [vmem:[%s1 + $0x148] sm:$0xff]
  %v68 = vld [vmem:[%s1 + $0x150] sm:$0xff]
  %v69 = vld [vmem:[%s1 + $0x158] sm:$0xff]
  %v70 = vld [vmem:[%s1 + $0x160] sm:$0xff]
  %v71 = vld [vmem:[%s1 + $0x168] sm:$0xff]
  %v72 = vld [vmem:[%s1 + $0x170] sm:$0xff]
  %v73 = vld [vmem:[%s1 + $0x178] sm:$0xff]
  %v74 = vld [vmem:[%s1 + $0x180] sm:$0xff]
  %v75 = vld [vmem:[%s1 + $0x188] sm:$0xff]
  %v76 = vld [vmem:[%s1 + $0x190] sm:$0xff]
  %v77 = vld [vmem:[%s1 + $0x198] sm:$0xff]
  %v78 = vld [vmem:[%s1 + $0x1a0] sm:$0xff]
  %v79 = vld [vmem:[%s1 + $0x1a8] sm:$0xff]
  %v80 = vld [vmem:[%s1 + $0x1b0] sm:$0xff]
  %v81 = vld [vmem:[%s1 + $0x1b8] sm:$0xff]
  %v82 = vld [vmem:[%s1 + $0x1c0] sm:$0xff]
  %v83 = vld [vmem:[%s1 + $0x1c8] sm:$0xff]
  %v84 = vld [vmem:[%s1 + $0x1d0] sm:$0xff]
  %v85 = vld [vmem:[%s1 + $0x1d8] sm:$0xff]
  %v86 = vld [vmem:[%s0] sm:$0xff]
  %v87 = vld [vmem:[%s0 + $0x8] sm:$0xff]
  %v88 = vld [vmem:[%s0 + $0x10] sm:$0xff]
  %v89 = vld [vmem:[%s0 + $0x18] sm:$0xff]
  %v90 = vld [vmem:[%s0 + $0x20] sm:$0xff]
  %v91 = vld [vmem:[%s0 + $0x28] sm:$0xff]
  %v92 = vld [vmem:[%s0 + $0x30] sm:$0xff]
  %v93 = vld [vmem:[%s0 + $0x38] sm:$0xff]
  %v94 = vld [vmem:[%s0 + $0x40] sm:$0xff]
  %v95 = vld [vmem:[%s0 + $0x48] sm:$0xff]
  %v96 = vld [vmem:[%s0 + $0x50] sm:$0xff]
  %v97 = vld [vmem:[%s0 + $0x58] sm:$0xff]
  %v98 = vld [vmem:[%s0 + $0x60] sm:$0xff]
  %v99 = vld [vmem:[%s0 + $0x68] sm:$0xff]
  %v100 = vld [vmem:[%s0 + $0x70] sm:$0xff]
  %v101 = vld [vmem:[%s0 + $0x78] sm:$0xff]
  %v102 = vld [vmem:[%s0 + $0x80] sm:$0xff]
  %v103 = vld [vmem:[%s0 + $0x88] sm:$0xff]
  %v104 = vld [vmem:[%s0 + $0x90] sm:$0xff]
  %v105 = vld [vmem:[%s0 + $0x98] sm:$0xff]
  %v106 = vld [vmem:[%s0 + $0xa0] sm:$0xff]
  %v107 = vld [vmem:[%s0 + $0xa8] sm:$0xff]
  %v108 = vld [vmem:[%s0 + $0xb0] sm:$0xff]
  %v109 = vld [vmem:[%s0 + $0xb8] sm:$0xff]
  %v110 = vld [vmem:[%s0 + $0xc0] sm:$0xff]
  %v111 = vld [vmem:[%s0 + $0xc8] sm:$0xff]
  %v112 = vld [vmem:[%s0 + $0xd0] sm:$0xff]
  %v113 = vld [vmem:[%s0 + $0xd8] sm:$0xff]
  %v114 = vld [vmem:[%s0 + $0xe0] sm:$0xff]
  %v115 = vld [vmem:[%s0 + $0xe8] sm:$0xff]
  %v116 = vld [vmem:[%s0 + $0xf0] sm:$0xff]
  %v117 = vld [vmem:[%s0 + $0xf8] sm:$0xff]
  %v118 = vld [vmem:[%s0 + $0x100] sm:$0xff]
  %v119 = vld [vmem:[%s0 + $0x108] sm:$0xff]
  %v120 = vld [vmem:[%s0 + $0x110] sm:$0xff]
  %v121 = vld [vmem:[%s0 + $0x118] sm:$0xff]
  %v122 = vld [vmem:[%s0 + $0x120] sm:$0xff]
  %v123 = vld [vmem:[%s0 + $0x128] sm:$0xff]
  %v124 = vld [vmem:[%s0 + $0x130] sm:$0xff]
  %v125 = vld [vmem:[%s0 + $0x138] sm:$0xff]
  %v126 = vld [vmem:[%s0 + $0x140] sm:$0xff]
  %v127 = vld [vmem:[%s0 + $0x148] sm:$0xff]
  %v128 = vld [vmem:[%s0 + $0x150] sm:$0xff]
  %v129 = vld [vmem:[%s0 + $0x158] sm:$0xff]
  %v130 = vld [vmem:[%s0 + $0x160] sm:$0xff]
  %v131 = vld [vmem:[%s0 + $0x168] sm:$0xff]
  %v132 = vld [vmem:[%s0 + $0x170] sm:$0xff]
  %v133 = vld [vmem:[%s0 + $0x178] sm:$0xff]
  %v134 = vld [vmem:[%s0 + $0x180] sm:$0xff]
  %v135 = vld [vmem:[%s0 + $0x188] sm:$0xff]
  %v136 = vld [vmem:[%s2] sm:$0xff]
  %v137 = vld [vmem:[%s2 + $0x8] sm:$0xff]
  %v138 = vld [vmem:[%s2 + $0x10] sm:$0xff]
  %v139 = vld [vmem:[%s2 + $0x18] sm:$0xff]
  %v140 = vld [vmem:[%s2 + $0x20] sm:$0xff]
  %v141 = vld [vmem:[%s2 + $0x28] sm:$0xff]
  %v142 = vld [vmem:[%s2 + $0x30] sm:$0xff]
  %v143 = vld [vmem:[%s2 + $0x38] sm:$0xff]
  %v144 = vld [vmem:[%s2 + $0x40] sm:$0xff]
  %v145 = vld [vmem:[%s2 + $0x48] sm:$0xff]
  %v146 = vld [vmem:[%s2 + $0x50] sm:$0xff]
  %v147 = vld [vmem:[%s2 + $0x58] sm:$0xff]
  %v148 = vld [vmem:[%s2 + $0x60] sm:$0xff]
  %v149 = vld [vmem:[%s2 + $0x68] sm:$0xff]
  %v150 = vld [vmem:[%s2 + $0x70] sm:$0xff]
  %152 = vset.pattern.permute.xlu0 0
  %153 = vperm.xlu0 %152, %v136
  %v154 = vpop.permute.xlu0 %153
  %157 = vset.pattern.permute.xlu0 0
  %158 = vperm.xlu0 %157, %v137
  %v159 = vpop.permute.xlu0 %158
  %162 = vset.pattern.permute.xlu0 0
  %163 = vperm.xlu0 %162, %v138
  %v164 = vpop.permute.xlu0 %163
  %167 = vset.pattern.permute.xlu0 0
  %168 = vperm.xlu0 %167, %v139
  %v169 = vpop.permute.xlu0 %168
  %172 = vset.pattern.permute.xlu0 0
  %173 = vperm.xlu0 %172, %v140
  %v174 = vpop.permute.xlu0 %173
  %177 = vset.pattern.permute.xlu0 0
  %178 = vperm.xlu0 %177, %v141
  %v179 = vpop.permute.xlu0 %178
  %182 = vset.pattern.permute.xlu0 0
  %183 = vperm.xlu0 %182, %v142
  %v184 = vpop.permute.xlu0 %183
  %187 = vset.pattern.permute.xlu0 0
  %188 = vperm.xlu0 %187, %v143
  %v189 = vpop.permute.xlu0 %188
  %192 = vset.pattern.permute.xlu0 0
  %193 = vperm.xlu0 %192, %v144
  %v194 = vpop.permute.xlu0 %193
  %197 = vset.pattern.permute.xlu0 0
  %198 = vperm.xlu0 %197, %v145
  %v199 = vpop.permute.xlu0 %198
  %202 = vset.pattern.permute.xlu0 0
  %203 = vperm.xlu0 %202, %v146
  %v204 = vpop.permute.xlu0 %203
  %207 = vset.pattern.permute.xlu0 0
  %208 = vperm.xlu0 %207, %v147
  %v209 = vpop.permute.xlu0 %208
  %212 = vset.pattern.permute.xlu0 0
  %213 = vperm.xlu0 %212, %v148
  %v214 = vpop.permute.xlu0 %213
  %217 = vset.pattern.permute.xlu0 0
  %218 = vperm.xlu0 %217, %v149
  %v219 = vpop.permute.xlu0 %218
  %222 = vset.pattern.permute.xlu0 0
  %223 = vperm.xlu0 %222, %v150
  %v224 = vpop.permute.xlu0 %223
  %vm226 = vcmask 130048
  %v228 = vsel %vm226, %v29, 0
  %v231 = vsel %vm226, %v33, 0
  %v234 = vsel %vm226, %v37, 0
  %v237 = vsel %vm226, %v41, 0
  %v240 = vsel %vm226, %v45, 0
  %v243 = vsel %vm226, %v49, 0
  %v246 = vsel %vm226, %v53, 0
  %v249 = vsel %vm226, %v57, 0
  %v252 = vsel %vm226, %v61, 0
  %v255 = vsel %vm226, %v65, 0
  %v258 = vsel %vm226, %v69, 0
  %v261 = vsel %vm226, %v73, 0
  %v264 = vsel %vm226, %v77, 0
  %v267 = vsel %vm226, %v81, 0
  %v270 = vsel %vm226, %v85, 0
  %272 = vmatprep.subr.mxu0 0.0
  %273 = vmatpush1.msra.mxu0 %v101
  %274 = vmatprep.subr.mxu0 0.0
  %275 = vmatpush1.msra.mxu0 %v100
  %276 = vmatprep.subr.mxu0 0.0
  %277 = vmatpush1.msra.mxu0 %v99
  %278 = vmatprep.subr.mxu0 0.0
  %279 = vmatpush1.msra.mxu0 %v98
  %280 = vmatprep.subr.mxu0 0.0
  %281 = vmatpush1.msra.mxu0 %v97
  %282 = vmatprep.subr.mxu0 0.0
  %283 = vmatpush1.msra.mxu0 %v96
  %284 = vmatprep.subr.mxu0 0.0
  %285 = vmatpush1.msra.mxu0 %v95
  %286 = vmatprep.subr.mxu0 0.0
  %287 = vmatpush1.msra.mxu0 %v94
  %288 = vmatprep.subr.mxu0 0.0
  %289 = vmatpush1.msra.mxu0 %v93
  %290 = vmatprep.subr.mxu0 0.0
  %291 = vmatpush1.msra.mxu0 %v92
  %292 = vmatprep.subr.mxu0 0.0
  %293 = vmatpush1.msra.mxu0 %v91
  %294 = vmatprep.subr.mxu0 0.0
  %295 = vmatpush1.msra.mxu0 %v90
  %296 = vmatprep.subr.mxu0 0.0
  %297 = vmatpush1.msra.mxu0 %v89
  %298 = vmatprep.subr.mxu0 0.0
  %299 = vmatpush1.msra.mxu0 %v88
  %300 = vmatprep.subr.mxu0 0.0
  %301 = vmatpush1.msra.mxu0 %v87
  %302 = vmatprep.subr.mxu0 0.0
  %303 = vmatpush1.msra.mxu0 %v86
  %304 = vmatprep.subr.mxu0 0.0
  %305 = vmatpush2.msra.mxu0 %v117
  %306 = vmatprep.subr.mxu0 0.0
  %307 = vmatpush2.msra.mxu0 %v116
  %308 = vmatprep.subr.mxu0 0.0
  %309 = vmatpush2.msra.mxu0 %v115
  %310 = vmatprep.subr.mxu0 0.0
  %311 = vmatpush2.msra.mxu0 %v114
  %312 = vmatprep.subr.mxu0 0.0
  %313 = vmatpush2.msra.mxu0 %v113
  %314 = vmatprep.subr.mxu0 0.0
  %315 = vmatpush2.msra.mxu0 %v112
  %316 = vmatprep.subr.mxu0 0.0
  %317 = vmatpush2.msra.mxu0 %v111
  %318 = vmatprep.subr.mxu0 0.0
  %319 = vmatpush2.msra.mxu0 %v110
  %320 = vmatprep.subr.mxu0 0.0
  %321 = vmatpush2.msra.mxu0 %v109
  %322 = vmatprep.subr.mxu0 0.0
  %323 = vmatpush2.msra.mxu0 %v108
  %324 = vmatprep.subr.mxu0 0.0
  %325 = vmatpush2.msra.mxu0 %v107
  %326 = vmatprep.subr.mxu0 0.0
  %327 = vmatpush2.msra.mxu0 %v106
  %328 = vmatprep.subr.mxu0 0.0
  %329 = vmatpush2.msra.mxu0 %v105
  %330 = vmatprep.subr.mxu0 0.0
  %331 = vmatpush2.msra.mxu0 %v104
  %332 = vmatprep.subr.mxu0 0.0
  %333 = vmatpush2.msra.mxu0 %v103
  %334 = vmatprep.subr.mxu0 0.0
  %335 = vmatpush2.msra.mxu0 %v102
  %336 = vmatprep.mubr.f32.mxu0 %v27
  %337 = vmatmul.mubr.f32.gmra.mxu0 %v26
  %v338 = vpop.f32.mrf.mxu0
  %v339 = vadd.f32 %v154, %v338
  %v340 = vpop.f32.mrf.mxu0
  %341 = vmatprep.mubr.f32.mxu0 %v31
  %342 = vmatmul.mubr.f32.gmra.mxu0 %v30
  %v343 = vpop.f32.mrf.mxu0
  %v344 = vadd.f32 %v159, %v343
  %v345 = vpop.f32.mrf.mxu0
  %346 = vmatprep.mubr.f32.mxu0 %v35
  %347 = vmatmul.mubr.f32.gmra.mxu0 %v34
  %v348 = vpop.f32.mrf.mxu0
  %v349 = vadd.f32 %v164, %v348
  %v350 = vpop.f32.mrf.mxu0
  %351 = vmatprep.mubr.f32.mxu0 %v39
  %352 = vmatmul.mubr.f32.gmra.mxu0 %v38
  %v353 = vpop.f32.mrf.mxu0
  %v354 = vadd.f32 %v169, %v353
  %v355 = vpop.f32.mrf.mxu0
  %356 = vmatprep.mubr.f32.mxu0 %v43
  %357 = vmatmul.mubr.f32.gmra.mxu0 %v42
  %v358 = vpop.f32.mrf.mxu0
  %v359 = vadd.f32 %v174, %v358
  %v360 = vpop.f32.mrf.mxu0
  %361 = vmatprep.mubr.f32.mxu0 %v47
  %362 = vmatmul.mubr.f32.gmra.mxu0 %v46
  %v363 = vpop.f32.mrf.mxu0
  %v364 = vadd.f32 %v179, %v363
  %v365 = vpop.f32.mrf.mxu0
  %366 = vmatprep.mubr.f32.mxu0 %v51
  %367 = vmatmul.mubr.f32.gmra.mxu0 %v50
  %v368 = vpop.f32.mrf.mxu0
  %v369 = vadd.f32 %v184, %v368
  %v370 = vpop.f32.mrf.mxu0
  %371 = vmatprep.mubr.f32.mxu0 %v55
  %372 = vmatmul.mubr.f32.gmra.mxu0 %v54
  %v373 = vpop.f32.mrf.mxu0
  %v374 = vadd.f32 %v189, %v373
  %v375 = vpop.f32.mrf.mxu0
  %376 = vmatprep.mubr.f32.mxu0 %v59
  %377 = vmatmul.mubr.f32.gmra.mxu0 %v58
  %v378 = vpop.f32.mrf.mxu0
  %v379 = vadd.f32 %v194, %v378
  %v380 = vpop.f32.mrf.mxu0
  %381 = vmatprep.mubr.f32.mxu0 %v63
  %382 = vmatmul.mubr.f32.gmra.mxu0 %v62
  %v383 = vpop.f32.mrf.mxu0
  %v384 = vadd.f32 %v199, %v383
  %v385 = vpop.f32.mrf.mxu0
  %386 = vmatprep.mubr.f32.mxu0 %v67
  %387 = vmatmul.mubr.f32.gmra.mxu0 %v66
  %v388 = vpop.f32.mrf.mxu0
  %v389 = vadd.f32 %v204, %v388
  %v390 = vpop.f32.mrf.mxu0
  %391 = vmatprep.mubr.f32.mxu0 %v71
  %392 = vmatmul.mubr.f32.gmra.mxu0 %v70
  %v393 = vpop.f32.mrf.mxu0
  %v394 = vadd.f32 %v209, %v393
  %v395 = vpop.f32.mrf.mxu0
  %396 = vmatprep.mubr.f32.mxu0 %v75
  %397 = vmatmul.mubr.f32.gmra.mxu0 %v74
  %v398 = vpop.f32.mrf.mxu0
  %v399 = vadd.f32 %v214, %v398
  %v400 = vpop.f32.mrf.mxu0
  %401 = vmatprep.mubr.f32.mxu0 %v79
  %402 = vmatmul.mubr.f32.gmra.mxu0 %v78
  %v403 = vpop.f32.mrf.mxu0
  %v404 = vadd.f32 %v219, %v403
  %v405 = vpop.f32.mrf.mxu0
  %406 = vmatprep.mubr.f32.mxu0 %v83
  %407 = vmatmul.mubr.f32.gmra.mxu0 %v82
  %v408 = vpop.f32.mrf.mxu0
  %v409 = vadd.f32 %v224, %v408
  %v410 = vpop.f32.mrf.mxu0
  %411 = vdwg.mxu0
  %412 = vmatprep.subr.mxu0 0.0
  %413 = vmatpush1.msra.mxu0 %v133
  %414 = vmatprep.subr.mxu0 0.0
  %415 = vmatpush1.msra.mxu0 %v132
  %416 = vmatprep.subr.mxu0 0.0
  %417 = vmatpush1.msra.mxu0 %v131
  %418 = vmatprep.subr.mxu0 0.0
  %419 = vmatpush1.msra.mxu0 %v130
  %420 = vmatprep.subr.mxu0 0.0
  %421 = vmatpush1.msra.mxu0 %v129
  %422 = vmatprep.subr.mxu0 0.0
  %423 = vmatpush1.msra.mxu0 %v128
  %424 = vmatprep.subr.mxu0 0.0
  %425 = vmatpush1.msra.mxu0 %v127
  %426 = vmatprep.subr.mxu0 0.0
  %427 = vmatpush1.msra.mxu0 %v126
  %428 = vmatprep.subr.mxu0 0.0
  %429 = vmatpush1.msra.mxu0 %v125
  %430 = vmatprep.subr.mxu0 0.0
  %431 = vmatpush1.msra.mxu0 %v124
  %432 = vmatprep.subr.mxu0 0.0
  %433 = vmatpush1.msra.mxu0 %v123
  %434 = vmatprep.subr.mxu0 0.0
  %435 = vmatpush1.msra.mxu0 %v122
  %436 = vmatprep.subr.mxu0 0.0
  %437 = vmatpush1.msra.mxu0 %v121
  %438 = vmatprep.subr.mxu0 0.0
  %439 = vmatpush1.msra.mxu0 %v120
  %440 = vmatprep.subr.mxu0 0.0
  %441 = vmatpush1.msra.mxu0 %v119
  %442 = vmatprep.subr.mxu0 0.0
  %443 = vmatpush1.msra.mxu0 %v118
  %444 = vmatprep.subr.mxu0 0.0
  %445 = vmatpush2.msra.mxu0 0.0
  %446 = vmatprep.subr.mxu0 0.0
  %447 = vmatpush2.msra.mxu0 0.0
  %448 = vmatprep.subr.mxu0 0.0
  %449 = vmatpush2.msra.mxu0 0.0
  %450 = vmatprep.subr.mxu0 0.0
  %451 = vmatpush2.msra.mxu0 0.0
  %452 = vmatprep.subr.mxu0 0.0
  %453 = vmatpush2.msra.mxu0 0.0
  %454 = vmatprep.subr.mxu0 0.0
  %455 = vmatpush2.msra.mxu0 0.0
  %456 = vmatprep.subr.mxu0 0.0
  %457 = vmatpush2.msra.mxu0 0.0
  %458 = vmatprep.subr.mxu0 0.0
  %459 = vmatpush2.msra.mxu0 0.0
  %460 = vmatprep.subr.mxu0 0.0
  %461 = vmatpush2.msra.mxu0 0.0
  %462 = vmatprep.subr.mxu0 0.0
  %463 = vmatpush2.msra.mxu0 0.0
  %464 = vmatprep.subr.mxu0 0.0
  %465 = vmatpush2.msra.mxu0 0.0
  %466 = vmatprep.subr.mxu0 0.0
  %467 = vmatpush2.msra.mxu0 0.0
  %468 = vmatprep.subr.mxu0 0.0
  %469 = vmatpush2.msra.mxu0 0.0
  %470 = vmatprep.subr.mxu0 0.0
  %471 = vmatpush2.msra.mxu0 0.0
  %472 = vmatprep.subr.mxu0 0.0
  %473 = vmatpush2.msra.mxu0 %v135
  %474 = vmatprep.subr.mxu0 0.0
  %475 = vmatpush2.msra.mxu0 %v134
  %476 = vmatprep.mubr.f32.mxu0 %v228
  %477 = vmatmul.mubr.f32.gmra.mxu0 %v28
  %v478 = vpop.f32.mrf.mxu0
  %v479 = vadd.f32 %v339, %v478
  %v480 = vpop.f32.mrf.mxu0
  %481 = vmatprep.mubr.f32.mxu0 %v231
  %482 = vmatmul.mubr.f32.gmra.mxu0 %v32
  %v483 = vpop.f32.mrf.mxu0
  %v484 = vadd.f32 %v344, %v483
  %v485 = vpop.f32.mrf.mxu0
  %486 = vmatprep.mubr.f32.mxu0 %v234
  %487 = vmatmul.mubr.f32.gmra.mxu0 %v36
  %v488 = vpop.f32.mrf.mxu0
  %v489 = vadd.f32 %v349, %v488
  %v490 = vpop.f32.mrf.mxu0
  %491 = vmatprep.mubr.f32.mxu0 %v237
  %492 = vmatmul.mubr.f32.gmra.mxu0 %v40
  %v493 = vpop.f32.mrf.mxu0
  %v494 = vadd.f32 %v354, %v493
  %v495 = vpop.f32.mrf.mxu0
  %496 = vmatprep.mubr.f32.mxu0 %v240
  %497 = vmatmul.mubr.f32.gmra.mxu0 %v44
  %v498 = vpop.f32.mrf.mxu0
  %v499 = vadd.f32 %v359, %v498
  %v500 = vpop.f32.mrf.mxu0
  %501 = vmatprep.mubr.f32.mxu0 %v243
  %502 = vmatmul.mubr.f32.gmra.mxu0 %v48
  %v503 = vpop.f32.mrf.mxu0
  %v504 = vadd.f32 %v364, %v503
  %v505 = vpop.f32.mrf.mxu0
  %506 = vmatprep.mubr.f32.mxu0 %v246
  %507 = vmatmul.mubr.f32.gmra.mxu0 %v52
  %v508 = vpop.f32.mrf.mxu0
  %v509 = vadd.f32 %v369, %v508
  %v510 = vpop.f32.mrf.mxu0
  %511 = vmatprep.mubr.f32.mxu0 %v249
  %512 = vmatmul.mubr.f32.gmra.mxu0 %v56
  %v513 = vpop.f32.mrf.mxu0
  %v514 = vadd.f32 %v374, %v513
  %v515 = vpop.f32.mrf.mxu0
  %516 = vmatprep.mubr.f32.mxu0 %v252
  %517 = vmatmul.mubr.f32.gmra.mxu0 %v60
  %v518 = vpop.f32.mrf.mxu0
  %v519 = vadd.f32 %v379, %v518
  %v520 = vpop.f32.mrf.mxu0
  %521 = vmatprep.mubr.f32.mxu0 %v255
  %522 = vmatmul.mubr.f32.gmra.mxu0 %v64
  %v523 = vpop.f32.mrf.mxu0
  %v524 = vadd.f32 %v384, %v523
  %v525 = vpop.f32.mrf.mxu0
  %526 = vmatprep.mubr.f32.mxu0 %v258
  %527 = vmatmul.mubr.f32.gmra.mxu0 %v68
  %v528 = vpop.f32.mrf.mxu0
  %v529 = vadd.f32 %v389, %v528
  %v530 = vpop.f32.mrf.mxu0
  %531 = vmatprep.mubr.f32.mxu0 %v261
  %532 = vmatmul.mubr.f32.gmra.mxu0 %v72
  %v533 = vpop.f32.mrf.mxu0
  %v534 = vadd.f32 %v394, %v533
  %v535 = vpop.f32.mrf.mxu0
  %536 = vmatprep.mubr.f32.mxu0 %v264
  %537 = vmatmul.mubr.f32.gmra.mxu0 %v76
  %v538 = vpop.f32.mrf.mxu0
  %v539 = vadd.f32 %v399, %v538
  %v540 = vpop.f32.mrf.mxu0
  %541 = vmatprep.mubr.f32.mxu0 %v267
  %542 = vmatmul.mubr.f32.gmra.mxu0 %v80
  %v543 = vpop.f32.mrf.mxu0
  %v544 = vadd.f32 %v404, %v543
  %v545 = vpop.f32.mrf.mxu0
  %546 = vmatprep.mubr.f32.mxu0 %v270
  %547 = vmatmul.mubr.f32.gmra.mxu0 %v84
  %v548 = vpop.f32.mrf.mxu0
  %v549 = vadd.f32 %v409, %v548
  %v550 = vpop.f32.mrf.mxu0
  %551 = vdwg.mxu0
  %v552 = vmax.f32 %v479, 0.0
  %v553 = vmax.f32 %v484, 0.0
  %v554 = vmax.f32 %v489, 0.0
  %v555 = vmax.f32 %v494, 0.0
  %v556 = vmax.f32 %v499, 0.0
  %v557 = vmax.f32 %v504, 0.0
  %v558 = vmax.f32 %v509, 0.0
  %v559 = vmax.f32 %v514, 0.0
  %v560 = vmax.f32 %v519, 0.0
  %v561 = vmax.f32 %v524, 0.0
  %v562 = vmax.f32 %v529, 0.0
  %v563 = vmax.f32 %v534, 0.0
  %v564 = vmax.f32 %v539, 0.0
  %v565 = vmax.f32 %v544, 0.0
  %v566 = vmax.f32 %v549, 0.0
  %v567 = vld [vmem:[%s3] sm:$0xff]
  %v568 = vld [vmem:[%s3 + $0x8] sm:$0xff]
  %v569 = vld [vmem:[%s3 + $0x10] sm:$0xff]
  %v570 = vld [vmem:[%s3 + $0x18] sm:$0xff]
  %v571 = vld [vmem:[%s3 + $0x20] sm:$0xff]
  %v572 = vld [vmem:[%s3 + $0x28] sm:$0xff]
  %v573 = vld [vmem:[%s3 + $0x30] sm:$0xff]
  %v574 = vld [vmem:[%s3 + $0x38] sm:$0xff]
  %v575 = vld [vmem:[%s3 + $0x40] sm:$0xff]
  %v576 = vld [vmem:[%s3 + $0x48] sm:$0xff]
  %v577 = vld [vmem:[%s3 + $0x50] sm:$0xff]
  %v578 = vld [vmem:[%s4] sm:$0xff]
  %v579 = vld [vmem:[%s4 + $0x8] sm:$0xff]
  %v580 = vld [vmem:[%s4 + $0x10] sm:$0xff]
  %v581 = vld [vmem:[%s4 + $0x18] sm:$0xff]
  %v582 = vld [vmem:[%s4 + $0x20] sm:$0xff]
  %v583 = vld [vmem:[%s4 + $0x28] sm:$0xff]
  %v584 = vld [vmem:[%s4 + $0x30] sm:$0xff]
  %v585 = vld [vmem:[%s4 + $0x38] sm:$0xff]
  %v586 = vld [vmem:[%s4 + $0x40] sm:$0xff]
  %v587 = vld [vmem:[%s4 + $0x48] sm:$0xff]
  %v588 = vld [vmem:[%s4 + $0x50] sm:$0xff]
  %590 = vset.pattern.permute.xlu0 0
  %591 = vperm.xlu0 %590, %v578
  %v592 = vpop.permute.xlu0 %591
  %595 = vset.pattern.permute.xlu0 0
  %596 = vperm.xlu0 %595, %v579
  %v597 = vpop.permute.xlu0 %596
  %600 = vset.pattern.permute.xlu0 0
  %601 = vperm.xlu0 %600, %v580
  %v602 = vpop.permute.xlu0 %601
  %605 = vset.pattern.permute.xlu0 0
  %606 = vperm.xlu0 %605, %v581
  %v607 = vpop.permute.xlu0 %606
  %610 = vset.pattern.permute.xlu0 0
  %611 = vperm.xlu0 %610, %v582
  %v612 = vpop.permute.xlu0 %611
  %615 = vset.pattern.permute.xlu0 0
  %616 = vperm.xlu0 %615, %v583
  %v617 = vpop.permute.xlu0 %616
  %620 = vset.pattern.permute.xlu0 0
  %621 = vperm.xlu0 %620, %v584
  %v622 = vpop.permute.xlu0 %621
  %625 = vset.pattern.permute.xlu0 0
  %626 = vperm.xlu0 %625, %v585
  %v627 = vpop.permute.xlu0 %626
  %630 = vset.pattern.permute.xlu0 0
  %631 = vperm.xlu0 %630, %v586
  %v632 = vpop.permute.xlu0 %631
  %635 = vset.pattern.permute.xlu0 0
  %636 = vperm.xlu0 %635, %v587
  %v637 = vpop.permute.xlu0 %636
  %640 = vset.pattern.permute.xlu0 0
  %641 = vperm.xlu0 %640, %v588
  %v642 = vpop.permute.xlu0 %641
  %vm644 = vcmask 982016
  %v646 = vsel %vm644, %v567, 0
  %v649 = vsel %vm644, %v568, 0
  %v652 = vsel %vm644, %v569, 0
  %v655 = vsel %vm644, %v570, 0
  %v658 = vsel %vm644, %v571, 0
  %v661 = vsel %vm644, %v572, 0
  %v664 = vsel %vm644, %v573, 0
  %v667 = vsel %vm644, %v574, 0
  %v670 = vsel %vm644, %v575, 0
  %v673 = vsel %vm644, %v576, 0
  %v676 = vsel %vm644, %v577, 0
  %678 = vmatprep.subr.mxu0 0.0
  %679 = vmatpush1.msra.mxu0 0.0
  %680 = vmatprep.subr.mxu0 0.0
  %681 = vmatpush1.msra.mxu0 %v566
  %682 = vmatprep.subr.mxu0 0.0
  %683 = vmatpush1.msra.mxu0 %v565
  %684 = vmatprep.subr.mxu0 0.0
  %685 = vmatpush1.msra.mxu0 %v564
  %686 = vmatprep.subr.mxu0 0.0
  %687 = vmatpush1.msra.mxu0 %v563
  %688 = vmatprep.subr.mxu0 0.0
  %689 = vmatpush1.msra.mxu0 %v562
  %690 = vmatprep.subr.mxu0 0.0
  %691 = vmatpush1.msra.mxu0 %v561
  %692 = vmatprep.subr.mxu0 0.0
  %693 = vmatpush1.msra.mxu0 %v560
  %694 = vmatprep.subr.mxu0 0.0
  %695 = vmatpush1.msra.mxu0 %v559
  %696 = vmatprep.subr.mxu0 0.0
  %697 = vmatpush1.msra.mxu0 %v558
  %698 = vmatprep.subr.mxu0 0.0
  %699 = vmatpush1.msra.mxu0 %v557
  %700 = vmatprep.subr.mxu0 0.0
  %701 = vmatpush1.msra.mxu0 %v556
  %702 = vmatprep.subr.mxu0 0.0
  %703 = vmatpush1.msra.mxu0 %v555
  %704 = vmatprep.subr.mxu0 0.0
  %705 = vmatpush1.msra.mxu0 %v554
  %706 = vmatprep.subr.mxu0 0.0
  %707 = vmatpush1.msra.mxu0 %v553
  %708 = vmatprep.subr.mxu0 0.0
  %709 = vmatpush1.msra.mxu0 %v552
  %710 = vmatprep.subr.mxu0 0.0
  %711 = vmatpush2.msra.mxu0 0.0
  %712 = vmatprep.subr.mxu0 0.0
  %713 = vmatpush2.msra.mxu0 0.0
  %714 = vmatprep.subr.mxu0 0.0
  %715 = vmatpush2.msra.mxu0 0.0
  %716 = vmatprep.subr.mxu0 0.0
  %717 = vmatpush2.msra.mxu0 0.0
  %718 = vmatprep.subr.mxu0 0.0
  %719 = vmatpush2.msra.mxu0 0.0
  %720 = vmatprep.subr.mxu0 0.0
  %721 = vmatpush2.msra.mxu0 0.0
  %722 = vmatprep.subr.mxu0 0.0
  %723 = vmatpush2.msra.mxu0 0.0
  %724 = vmatprep.subr.mxu0 0.0
  %725 = vmatpush2.msra.mxu0 0.0
  %726 = vmatprep.subr.mxu0 0.0
  %727 = vmatpush2.msra.mxu0 0.0
  %728 = vmatprep.subr.mxu0 0.0
  %729 = vmatpush2.msra.mxu0 0.0
  %730 = vmatprep.subr.mxu0 0.0
  %731 = vmatpush2.msra.mxu0 0.0
  %732 = vmatprep.subr.mxu0 0.0
  %733 = vmatpush2.msra.mxu0 0.0
  %734 = vmatprep.subr.mxu0 0.0
  %735 = vmatpush2.msra.mxu0 0.0
  %736 = vmatprep.subr.mxu0 0.0
  %737 = vmatpush2.msra.mxu0 0.0
  %738 = vmatprep.subr.mxu0 0.0
  %739 = vmatpush2.msra.mxu0 0.0
  %740 = vmatprep.subr.mxu0 0.0
  %741 = vmatpush2.msra.mxu0 0.0
  %742 = vmatprep.mubr.f32.mxu0 0.0
  %743 = vmatmul.mubr.f32.gmra.mxu0 %v646
  %v744 = vpop.f32.mrf.mxu0
  %v745 = vadd.f32 %v592, %v744
  %v746 = vpop.f32.mrf.mxu0
  %747 = vmatprep.mubr.f32.mxu0 0.0
  %748 = vmatmul.mubr.f32.gmra.mxu0 %v649
  %v749 = vpop.f32.mrf.mxu0
  %v750 = vadd.f32 %v597, %v749
  %v751 = vpop.f32.mrf.mxu0
  %752 = vmatprep.mubr.f32.mxu0 0.0
  %753 = vmatmul.mubr.f32.gmra.mxu0 %v652
  %v754 = vpop.f32.mrf.mxu0
  %v755 = vadd.f32 %v602, %v754
  %v756 = vpop.f32.mrf.mxu0
  %757 = vmatprep.mubr.f32.mxu0 0.0
  %758 = vmatmul.mubr.f32.gmra.mxu0 %v655
  %v759 = vpop.f32.mrf.mxu0
  %v760 = vadd.f32 %v607, %v759
  %v761 = vpop.f32.mrf.mxu0
  %762 = vmatprep.mubr.f32.mxu0 0.0
  %763 = vmatmul.mubr.f32.gmra.mxu0 %v658
  %v764 = vpop.f32.mrf.mxu0
  %v765 = vadd.f32 %v612, %v764
  %v766 = vpop.f32.mrf.mxu0
  %767 = vmatprep.mubr.f32.mxu0 0.0
  %768 = vmatmul.mubr.f32.gmra.mxu0 %v661
  %v769 = vpop.f32.mrf.mxu0
  %v770 = vadd.f32 %v617, %v769
  %v771 = vpop.f32.mrf.mxu0
  %772 = vmatprep.mubr.f32.mxu0 0.0
  %773 = vmatmul.mubr.f32.gmra.mxu0 %v664
  %v774 = vpop.f32.mrf.mxu0
  %v775 = vadd.f32 %v622, %v774
  %v776 = vpop.f32.mrf.mxu0
  %777 = vmatprep.mubr.f32.mxu0 0.0
  %778 = vmatmul.mubr.f32.gmra.mxu0 %v667
  %v779 = vpop.f32.mrf.mxu0
  %v780 = vadd.f32 %v627, %v779
  %v781 = vpop.f32.mrf.mxu0
  %782 = vmatprep.mubr.f32.mxu0 0.0
  %783 = vmatmul.mubr.f32.gmra.mxu0 %v670
  %v784 = vpop.f32.mrf.mxu0
  %v785 = vadd.f32 %v632, %v784
  %v786 = vpop.f32.mrf.mxu0
  %787 = vmatprep.mubr.f32.mxu0 0.0
  %788 = vmatmul.mubr.f32.gmra.mxu0 %v673
  %v789 = vpop.f32.mrf.mxu0
  %v790 = vadd.f32 %v637, %v789
  %v791 = vpop.f32.mrf.mxu0
  %792 = vmatprep.mubr.f32.mxu0 0.0
  %793 = vmatmul.mubr.f32.gmra.mxu0 %v676
  %v794 = vpop.f32.mrf.mxu0
  %v795 = vadd.f32 %v642, %v794
  %v796 = vpop.f32.mrf.mxu0
  %797 = vdwg.mxu0
  %v798 = vmax.f32 %v745, 0.0
  %v799 = vmax.f32 %v750, 0.0
  %v800 = vmax.f32 %v755, 0.0
  %v801 = vmax.f32 %v760, 0.0
  %v802 = vmax.f32 %v765, 0.0
  %v803 = vmax.f32 %v770, 0.0
  %v804 = vmax.f32 %v775, 0.0
  %v805 = vmax.f32 %v780, 0.0
  %v806 = vmax.f32 %v785, 0.0
  %v807 = vmax.f32 %v790, 0.0
  %v808 = vmax.f32 %v795, 0.0
  %v809 = vld [vmem:[%s5] sm:$0xff]
  %v810 = vld [vmem:[%s5 + $0x8] sm:$0xff]
  %v811 = vld [vmem:[%s6] sm:$0xff]
  %v812 = vld [vmem:[%s6 + $0x8] sm:$0xff]
  %814 = vset.pattern.permute.xlu0 0
  %815 = vperm.xlu0 %814, %v811
  %v816 = vpop.permute.xlu0 %815
  %819 = vset.pattern.permute.xlu0 0
  %820 = vperm.xlu0 %819, %v812
  %v821 = vpop.permute.xlu0 %820
  %vm823 = vcmask 719872
  %v825 = vsel %vm823, %v809, 0
  %v828 = vsel %vm823, %v810, 0
  %830 = vmatprep.subr.mxu0 0.0
  %831 = vmatpush1.msra.mxu0 0.0
  %832 = vmatprep.subr.mxu0 0.0
  %833 = vmatpush1.msra.mxu0 0.0
  %834 = vmatprep.subr.mxu0 0.0
  %835 = vmatpush1.msra.mxu0 0.0
  %836 = vmatprep.subr.mxu0 0.0
  %837 = vmatpush1.msra.mxu0 0.0
  %838 = vmatprep.subr.mxu0 0.0
  %839 = vmatpush1.msra.mxu0 0.0
  %840 = vmatprep.subr.mxu0 0.0
  %841 = vmatpush1.msra.mxu0 %v808
  %842 = vmatprep.subr.mxu0 0.0
  %843 = vmatpush1.msra.mxu0 %v807
  %844 = vmatprep.subr.mxu0 0.0
  %845 = vmatpush1.msra.mxu0 %v806
  %846 = vmatprep.subr.mxu0 0.0
  %847 = vmatpush1.msra.mxu0 %v805
  %848 = vmatprep.subr.mxu0 0.0
  %849 = vmatpush1.msra.mxu0 %v804
  %850 = vmatprep.subr.mxu0 0.0
  %851 = vmatpush1.msra.mxu0 %v803
  %852 = vmatprep.subr.mxu0 0.0
  %853 = vmatpush1.msra.mxu0 %v802
  %854 = vmatprep.subr.mxu0 0.0
  %855 = vmatpush1.msra.mxu0 %v801
  %856 = vmatprep.subr.mxu0 0.0
  %857 = vmatpush1.msra.mxu0 %v800
  %858 = vmatprep.subr.mxu0 0.0
  %859 = vmatpush1.msra.mxu0 %v799
  %860 = vmatprep.subr.mxu0 0.0
  %861 = vmatpush1.msra.mxu0 %v798
  %862 = vmatprep.subr.mxu0 0.0
  %863 = vmatpush2.msra.mxu0 0.0
  %864 = vmatprep.subr.mxu0 0.0
  %865 = vmatpush2.msra.mxu0 0.0
  %866 = vmatprep.subr.mxu0 0.0
  %867 = vmatpush2.msra.mxu0 0.0
  %868 = vmatprep.subr.mxu0 0.0
  %869 = vmatpush2.msra.mxu0 0.0
  %870 = vmatprep.subr.mxu0 0.0
  %871 = vmatpush2.msra.mxu0 0.0
  %872 = vmatprep.subr.mxu0 0.0
  %873 = vmatpush2.msra.mxu0 0.0
  %874 = vmatprep.subr.mxu0 0.0
  %875 = vmatpush2.msra.mxu0 0.0
  %876 = vmatprep.subr.mxu0 0.0
  %877 = vmatpush2.msra.mxu0 0.0
  %878 = vmatprep.subr.mxu0 0.0
  %879 = vmatpush2.msra.mxu0 0.0
  %880 = vmatprep.subr.mxu0 0.0
  %881 = vmatpush2.msra.mxu0 0.0
  %882 = vmatprep.subr.mxu0 0.0
  %883 = vmatpush2.msra.mxu0 0.0
  %884 = vmatprep.subr.mxu0 0.0
  %885 = vmatpush2.msra.mxu0 0.0
  %886 = vmatprep.subr.mxu0 0.0
  %887 = vmatpush2.msra.mxu0 0.0
  %888 = vmatprep.subr.mxu0 0.0
  %889 = vmatpush2.msra.mxu0 0.0
  %890 = vmatprep.subr.mxu0 0.0
  %891 = vmatpush2.msra.mxu0 0.0
  %892 = vmatprep.subr.mxu0 0.0
  %893 = vmatpush2.msra.mxu0 0.0
  %894 = vmatprep.mubr.f32.mxu0 0.0
  %895 = vmatmul.mubr.f32.gmra.mxu0 %v825
  %v896 = vpop.f32.mrf.mxu0
  %v897 = vadd.f32 %v816, %v896
  %v898 = vpop.f32.mrf.mxu0
  %899 = vmatprep.mubr.f32.mxu0 0.0
  %900 = vmatmul.mubr.f32.gmra.mxu0 %v828
  %v901 = vpop.f32.mrf.mxu0
  %v902 = vadd.f32 %v821, %v901
  %v903 = vpop.f32.mrf.mxu0
  %904 = vdwg.mxu0
  %905 = vst [vmem:[%s7] sm:$0xff] %v897
  %906 = vst [vmem:[%s7 + $0x8] sm:$0xff] %v902
  // Predicated region
  $region30: #{lenet5_forward.5} parent=0 // pred_check
    _
  $region31: #{lenet5_forward.5} parent=0 // pred_check_branch
    %908 = sbr.rel (0) target = $region33
  $region32: #{lenet5_forward.5} parent=0 // pred_region
    _
  $region33: #{lenet5_forward.5} parent=0 // pred_fallthru
    _
  // Predicated region
  $region34: #{lenet5_forward.5} parent=0 // pred_check
    _
  $region35: #{lenet5_forward.5} parent=0 // pred_check_branch
    %910 = sbr.rel (0) target = $region37
  $region36: #{lenet5_forward.5} parent=0 // pred_region
    _
  $region37: #{lenet5_forward.5} parent=0 // pred_fallthru
    _

</llo_original>
